<compile_context>
chip_gen: v6e
topology: v6e:2x2x1
jax: 0.10.0
libtpu: 0.0.40
codegen_flags: <defaults>
</compile_context>

<pallas_src>
import jax
import jax.numpy as jnp
from jax import lax
from jax.experimental import pallas as pl
from jax.experimental.pallas import tpu as pltpu


# ---------------------------------------------------------------------------
# Helpers: tile pickers (avoid post-hoc slices, keep (8,128)-legal, lane-dense)
# ---------------------------------------------------------------------------
def _round_up(x, m):
    return ((x + m - 1) // m) * m


def _pick_row_tile(M, target):
    """Largest tile <= target that divides M (and is sublane-legal); else pad."""
    t = min(target, M)
    for cand in range(t, 0, -1):
        if M % cand == 0 and (cand % 8 == 0 or cand == M):
            return cand, M
    # Fallback (rare ragged M): pad and slice afterwards.
    # TODO(synk): masked-store tail row tile instead of slicing the padded output.
    tm = min(target, _round_up(M, 8))
    return tm, _round_up(M, tm)


def _pick_col_tile(N, target):
    """Pad N up to a 128 multiple; pick a lane-dense 128-multiple tile dividing Np."""
    Np = _round_up(N, 128)
    t = (min(target, Np) // 128) * 128
    for cand in range(t, 127, -128):
        if Np % cand == 0:
            return cand, Np
    return 128, Np


# ---------------------------------------------------------------------------
# Stage 1 & 3: tiled matmul + bias kernel:  O = A @ B + bias
# ---------------------------------------------------------------------------
def _matmul_bias_kernel(a_ref, b_ref, bias_ref, o_ref):
    o_ref[...] = (
        jnp.dot(a_ref[...], b_ref[...], preferred_element_type=jnp.float32)
        + bias_ref[...]
    ).astype(o_ref.dtype)


def pallas_matmul_bias(a, b, bias, *, tm_target=512, tn_target=512,
                       out_dtype=jnp.float32):
    """a: (M, K), b: (K, N), bias: (N,) -> (M, N) out_dtype.

    K (embed/hidden size) is kept resident; grid tiles (M, N) with large tiles so
    per-grid-step overhead (~0.35us) is amortized.  N is padded to a 128 multiple
    (lane-dense unmasked stores, small weight/output blocks for huge vocab sizes).
    """
    M, K = a.shape
    Kb, N = b.shape
    assert K == Kb and bias.shape[-1] == N

    a = a.astype(jnp.bfloat16)
    b = b.astype(jnp.bfloat16)
    bias = bias.reshape(1, N).astype(jnp.float32)

    tm, Mp = _pick_row_tile(M, tm_target)
    tn, Np = _pick_col_tile(N, tn_target)

    if Mp != M:
        a = jnp.pad(a, ((0, Mp - M), (0, 0)))
    if Np != N:
        b = jnp.pad(b, ((0, 0), (0, Np - N)))
        bias = jnp.pad(bias, ((0, 0), (0, Np - N)))

    out = pl.pallas_call(
        _matmul_bias_kernel,
        out_shape=jax.ShapeDtypeStruct((Mp, Np), out_dtype),
        grid_spec=pltpu.PrefetchScalarGridSpec(
            num_scalar_prefetch=0,
            grid=(Mp // tm, Np // tn),          # N inner: W block streamed per row tile
            in_specs=[
                pl.BlockSpec((tm, K), lambda i, j: (i, 0)),
                pl.BlockSpec((K, tn), lambda i, j: (0, j)),
                pl.BlockSpec((1, tn), lambda i, j: (0, j)),
            ],
            out_specs=pl.BlockSpec((tm, tn), lambda i, j: (i, j)),
        ),
        compiler_params=pltpu.CompilerParams(
            dimension_semantics=("parallel", "parallel"),
            vmem_limit_bytes=48 * 1024 * 1024,
        ),
    )(a, b, bias)
    if Mp != M or Np != N:
        out = out[:M, :N]
    return out


# ---------------------------------------------------------------------------
# Stage 2: serial LSTM recurrence (batch tiles parallel, time tiles sequential)
# ---------------------------------------------------------------------------
def _lstm_recurrence_kernel(xw_ref, whh_ref, hid_ref, h_sc, c_sc):
    """
    xw_ref : (tb, tt, 4H) f32   precomputed x @ W_ih^T + (b_ih + b_hh), batch-major
    whh_ref: (H, 4H)      bf16  W_hh^T (gate columns in PyTorch order i, f, g, o)
    hid_ref: (tb, tt, H)  bf16  hidden states (output, batch-major)
    h_sc, c_sc: (tb, H)   f32   persistent hidden / cell state (carried across time tiles)
    """
    H = whh_ref.shape[0]
    tt = xw_ref.shape[1]

    @pl.when(pl.program_id(1) == 0)          # first time tile of this batch tile
    def _():
        h_sc[...] = jnp.zeros_like(h_sc)
        c_sc[...] = jnp.zeros_like(c_sc)

    # Small static time tile -> modest static unroll; live ranges bounded per grid step.
    for t in range(tt):
        h_b = h_sc[...].astype(jnp.bfloat16)
        # ONE fused (tb,H)x(H,4H) MXU matmul per serial step (instead of 4 per-gate dots).
        gates = xw_ref[:, t, :] + jnp.dot(
            h_b, whh_ref[...], preferred_element_type=jnp.float32)
        # TODO(synk): on v6e/v7x the transcendentals could run in bf16 for ~2x EUP throughput.
        i_g = jax.nn.sigmoid(gates[:, 0 * H:1 * H])
        f_g = jax.nn.sigmoid(gates[:, 1 * H:2 * H])
        g_g = jnp.tanh(gates[:, 2 * H:3 * H])
        o_g = jax.nn.sigmoid(gates[:, 3 * H:4 * H])
        c_new = f_g * c_sc[...] + i_g * g_g
        h_new = o_g * jnp.tanh(c_new)
        c_sc[...] = c_new
        h_sc[...] = h_new
        hid_ref[:, t, :] = h_new.astype(hid_ref.dtype)


def _pick_time_tile(T):
    # Block's second-to-last dim must be a multiple of 8 or the full T.
    if T > 8 and T % 8 == 0:
        return 8
    return T


def _pick_batch_tile(B, tt, H, budget=40 * 1024 * 1024):
    """Fewest batch tiles whose double-buffered blocks fit the VMEM budget.

    Fewer, fatter tiles minimize serial per-step overhead on single-core chips.
    TODO(synk): on v7x prefer exactly 2 tiles (one per TensorCore) when B allows.
    """
    def est(tb):
        return (2 * tb * tt * 4 * H * 4      # xw blocks (f32, double-buffered)
                + 2 * tb * tt * H * 2        # hid blocks (bf16, double-buffered)
                + 2 * 4 * H * H * 2          # W_hh^T block (bf16)
                + 2 * tb * H * 4)            # h / c scratch (f32)
    for ntiles in range(1, B + 1):
        if B % ntiles == 0 and est(B // ntiles) <= budget:
            return B // ntiles
    return 1


def lstm_recurrence(xw, w_hh_t):
    """xw: (B, T, 4H) f32 batch-major, w_hh_t: (H, 4H) bf16 -> hidden (B, T, H) bf16."""
    B, T, H4 = xw.shape
    H = H4 // 4
    tt = _pick_time_tile(T)
    tb = _pick_batch_tile(B, tt, H)
    return pl.pallas_call(
        _lstm_recurrence_kernel,
        out_shape=jax.ShapeDtypeStruct((B, T, H), jnp.bfloat16),
        grid_spec=pltpu.PrefetchScalarGridSpec(
            num_scalar_prefetch=0,
            grid=(B // tb, T // tt),
            in_specs=[
                pl.BlockSpec((tb, tt, 4 * H), lambda i, j: (i, j, 0)),
                pl.BlockSpec((H, 4 * H), lambda i, j: (0, 0)),
            ],
            out_specs=pl.BlockSpec((tb, tt, H), lambda i, j: (i, j, 0)),
            scratch_shapes=[
                pltpu.VMEM((tb, H), jnp.float32),   # h state
                pltpu.VMEM((tb, H), jnp.float32),   # c state
            ],
        ),
        compiler_params=pltpu.CompilerParams(
            dimension_semantics=("parallel", "arbitrary"),  # batch tiles // , time sequential
            vmem_limit_bytes=48 * 1024 * 1024,
        ),
    )(xw, w_hh_t)


# ---------------------------------------------------------------------------
# Parameters / forward
# ---------------------------------------------------------------------------
def init_params(key, embed_size, hidden_size, vocab_size):
    """Deterministic synthetic init matching the PyTorch module's shapes."""
    ks = jax.random.split(key, 6)
    k = 1.0 / jnp.sqrt(hidden_size)
    return {
        "embed": jax.random.uniform(ks[0], (vocab_size, embed_size), jnp.float32, -0.1, 0.1),
        "w_ih": jax.random.uniform(ks[1], (4 * hidden_size, embed_size), jnp.float32, -k, k),
        "w_hh": jax.random.uniform(ks[2], (4 * hidden_size, hidden_size), jnp.float32, -k, k),
        "b_ih": jax.random.uniform(ks[3], (4 * hidden_size,), jnp.float32, -k, k),
        "b_hh": jax.random.uniform(ks[4], (4 * hidden_size,), jnp.float32, -k, k),
        "w_lin": jax.random.uniform(ks[5], (vocab_size, hidden_size), jnp.float32, -0.1, 0.1),
        "b_lin": jnp.zeros((vocab_size,), jnp.float32),
    }


def image_captioner_forward(features, captions, params):
    """features: (B, E) f32, captions: (B, T) int32 -> (B, T, V) vocab scores (bf16)."""
    B, E = features.shape
    T = captions.shape[1]
    H = params["w_hh"].shape[1]
    V = params["w_lin"].shape[0]

    # Glue (tiny): embedding lookup, prepend image feature, drop last token (batch-major).
    tok_emb = params["embed"][captions]                                   # (B, T, E)
    inputs = jnp.concatenate([features[:, None, :], tok_emb[:, :-1, :]], axis=1)

    # Weight prep: bf16 matmul operands, f32 biases.
    w_ih_t = params["w_ih"].T.astype(jnp.bfloat16)                        # (E, 4H)
    b_gate = (params["b_ih"] + params["b_hh"]).astype(jnp.float32)        # (4H,)
    w_hh_t = params["w_hh"].T.astype(jnp.bfloat16)                        # (H, 4H)
    w_lin_t = params["w_lin"].T.astype(jnp.bfloat16)                      # (H, V)
    b_lin = params["b_lin"].astype(jnp.float32)                           # (V,)

    # 1) Hoisted input->gates GEMM, batch-major: no transposes anywhere in the pipeline.
    xw = pallas_matmul_bias(inputs.reshape(B * T, E), w_ih_t, b_gate,
                            tm_target=512, tn_target=512).reshape(B, T, 4 * H)

    # 2) Serial LSTM recurrence: one fused h @ W_hh^T matmul per step; emits bf16
    #    batch-major hidden states that stage 3 consumes with zero data movement.
    hid = lstm_recurrence(xw, w_hh_t)                                     # (B, T, H) bf16

    # 3) Deferred vocab projection; large row tile amortizes W_lin streaming and
    #    bf16 logits halve the dominant (B, T, V) HBM writeback.
    out2d = pallas_matmul_bias(hid.reshape(B * T, H), w_lin_t, b_lin,
                               tm_target=1024, tn_target=512,
                               out_dtype=jnp.bfloat16)                    # (B*T, V) bf16
    return out2d.reshape(B, T, V)


# ---------------------------------------------------------------------------
# Pure-JAX reference (mirrors the kernel's bf16-operand / f32-accumulate numerics)
# ---------------------------------------------------------------------------
def reference_forward(features, captions, params):
    H = params["w_hh"].shape[1]
    bf = jnp.bfloat16
    tok_emb = params["embed"][captions]
    inputs = jnp.concatenate([features[:, None, :], tok_emb[:, :-1, :]], axis=1)
    B, T, E = inputs.shape

    w_ih_t = params["w_ih"].T.astype(bf)
    w_hh_t = params["w_hh"].T.astype(bf)
    w_lin_t = params["w_lin"].T.astype(bf)
    b = (params["b_ih"] + params["b_hh"]).astype(jnp.float32)

    xw = (jnp.dot(inputs.reshape(B * T, E).astype(bf), w_ih_t,
                  preferred_element_type=jnp.float32).reshape(B, T, 4 * H) + b)
    xw_tm = jnp.transpose(xw, (1, 0, 2))                                  # (T, B, 4H)

    def step(carry, xw_t):
        h, c = carry
        gates = xw_t + jnp.dot(h.astype(bf), w_hh_t, preferred_element_type=jnp.float32)
        i_g = jax.nn.sigmoid(gates[:, 0 * H:1 * H])
        f_g = jax.nn.sigmoid(gates[:, 1 * H:2 * H])
        g_g = jnp.tanh(gates[:, 2 * H:3 * H])
        o_g = jax.nn.sigmoid(gates[:, 3 * H:4 * H])
        c = f_g * c + i_g * g_g
        h = o_g * jnp.tanh(c)
        return (h, c), h

    h0 = jnp.zeros((B, H), jnp.float32)
    c0 = jnp.zeros((B, H), jnp.float32)
    _, hs = lax.scan(step, (h0, c0), xw_tm)                               # (T, B, H)
    hs = jnp.transpose(hs, (1, 0, 2))                                     # (B, T, H)

    out = (jnp.dot(hs.reshape(B * T, H).astype(bf), w_lin_t,
                   preferred_element_type=jnp.float32)
           + params["b_lin"]).reshape(B, T, -1)
    return out                                                            # (B, T, V) f32


if __name__ == "__main__":
    # Small shapes consistent with the module's forward.
    B, T = 4, 8            # batch, caption_length
    E, H, V = 32, 32, 128  # embed_size, hidden_size, vocab_size

    key = jax.random.PRNGKey(0)
    k_par, k_feat, k_cap = jax.random.split(key, 3)

    params = init_params(k_par, E, H, V)
    features = jax.random.normal(k_feat, (B, E), jnp.float32)
    captions = jax.random.randint(k_cap, (B, T), 0, V, jnp.int32)

    fwd = jax.jit(image_captioner_forward)
    out = jax.block_until_ready(fwd(features, captions, params))

    ref = jax.block_until_ready(reference_forward(features, captions, params))
    assert out.shape == (B, T, V), out.shape
    err = jnp.max(jnp.abs(out.astype(jnp.float32) - ref))
    assert err < 3e-2, f"max abs diff {err}"

    print("KERNEL_OK")
</pallas_src>

<mosaic_0001>
module attributes {stable_mosaic.version = 11 : i64} {
  func.func @_matmul_bias_kernel(%arg0: i32, %arg1: i32, %arg2: memref<32x32xbf16, #tpu.memory_space<vmem>>, %arg3: memref<32x128xbf16, #tpu.memory_space<vmem>>, %arg4: memref<1x128xf32, #tpu.memory_space<vmem>>, %arg5: memref<32x128xf32, #tpu.memory_space<vmem>>) attributes {dimension_semantics = [#tpu.dimension_semantics<parallel>, #tpu.dimension_semantics<parallel>], iteration_bounds = array<i64: 1, 1>, scalar_prefetch = 0 : i64, scratch_operands = 0 : i64, tpu.core_type = #tpu.core_type<tc>, window_params = [{transform_indices = @transform_0, window_bounds = array<i64: 32, 32>}, {transform_indices = @transform_1, window_bounds = array<i64: 32, 128>}, {transform_indices = @transform_2, window_bounds = array<i64: 1, 128>}, {transform_indices = @transform_3, window_bounds = array<i64: 32, 128>}]} {
    %c0 = arith.constant 0 : index
    %c0_0 = arith.constant 0 : index
    %0 = vector.load %arg2[%c0, %c0_0] : memref<32x32xbf16, #tpu.memory_space<vmem>>, vector<32x32xbf16>
    %c0_1 = arith.constant 0 : index
    %c0_2 = arith.constant 0 : index
    %1 = vector.load %arg3[%c0_1, %c0_2] : memref<32x128xbf16, #tpu.memory_space<vmem>>, vector<32x128xbf16>
    %cst = arith.constant dense<0.000000e+00> : vector<32x128xf32>
    %2 = tpu.matmul %0, %1, %cst {dimension_numbers = #tpu.dot_dimension_numbers<[1], [0], [0], [1], [0, 0, 1, 1], [], []>} : vector<32x32xbf16>, vector<32x128xbf16>, vector<32x128xf32> -> vector<32x128xf32>
    %c0_3 = arith.constant 0 : index
    %c0_4 = arith.constant 0 : index
    %3 = vector.load %arg4[%c0_3, %c0_4] : memref<1x128xf32, #tpu.memory_space<vmem>>, vector<1x128xf32>
    %4 = vector.broadcast %3 : vector<1x128xf32> to vector<32x128xf32>
    %5 = arith.addf %2, %4 : vector<32x128xf32>
    %c0_5 = arith.constant 0 : index
    %c0_6 = arith.constant 0 : index
    %6 = vector.load %arg5[%c0_5, %c0_6] : memref<32x128xf32, #tpu.memory_space<vmem>>, vector<32x128xf32>
    tpu.vector_store %arg5[%c0_5, %c0_6], %5 {strides = array<i32>} : memref<32x128xf32, #tpu.memory_space<vmem>>, vector<32x128xf32>,
    return
  }
  func.func @transform_0(%arg0: i32, %arg1: i32) -> (i32, i32) {
    %c0_i32 = arith.constant 0 : i32
    %c0_i32_0 = arith.constant 0 : i32
    return %arg0, %c0_i32 : i32, i32
  }
  func.func @transform_1(%arg0: i32, %arg1: i32) -> (i32, i32) {
    %c0_i32 = arith.constant 0 : i32
    %c0_i32_0 = arith.constant 0 : i32
    return %c0_i32, %arg1 : i32, i32
  }
  func.func @transform_2(%arg0: i32, %arg1: i32) -> (i32, i32) {
    %c0_i32 = arith.constant 0 : i32
    %c0_i32_0 = arith.constant 0 : i32
    return %c0_i32, %arg1 : i32, i32
  }
  func.func @transform_3(%arg0: i32, %arg1: i32) -> (i32, i32) {
    %c0_i32 = arith.constant 0 : i32
    return %arg0, %arg1 : i32, i32
  }
}

module attributes {stable_mosaic.version = 11 : i64} {
  func.func @_matmul_bias_kernel(%arg0: i32, %arg1: i32, %arg2: memref<32x32xbf16, #tpu.memory_space<vmem>>, %arg3: memref<32x128xbf16, #tpu.memory_space<vmem>>, %arg4: memref<1x128xf32, #tpu.memory_space<vmem>>, %arg5: memref<32x128xbf16, #tpu.memory_space<vmem>>) attributes {dimension_semantics = [#tpu.dimension_semantics<parallel>, #tpu.dimension_semantics<parallel>], iteration_bounds = array<i64: 1, 1>, scalar_prefetch = 0 : i64, scratch_operands = 0 : i64, tpu.core_type = #tpu.core_type<tc>, window_params = [{transform_indices = @transform_0, window_bounds = array<i64: 32, 32>}, {transform_indices = @transform_1, window_bounds = array<i64: 32, 128>}, {transform_indices = @transform_2, window_bounds = array<i64: 1, 128>}, {transform_indices = @transform_3, window_bounds = array<i64: 32, 128>}]} {
    %c0 = arith.constant 0 : index
    %c0_0 = arith.constant 0 : index
    %0 = vector.load %arg2[%c0, %c0_0] : memref<32x32xbf16, #tpu.memory_space<vmem>>, vector<32x32xbf16>
    %c0_1 = arith.constant 0 : index
    %c0_2 = arith.constant 0 : index
    %1 = vector.load %arg3[%c0_1, %c0_2] : memref<32x128xbf16, #tpu.memory_space<vmem>>, vector<32x128xbf16>
    %cst = arith.constant dense<0.000000e+00> : vector<32x128xf32>
    %2 = tpu.matmul %0, %1, %cst {dimension_numbers = #tpu.dot_dimension_numbers<[1], [0], [0], [1], [0, 0, 1, 1], [], []>} : vector<32x32xbf16>, vector<32x128xbf16>, vector<32x128xf32> -> vector<32x128xf32>
    %c0_3 = arith.constant 0 : index
    %c0_4 = arith.constant 0 : index
    %3 = vector.load %arg4[%c0_3, %c0_4] : memref<1x128xf32, #tpu.memory_space<vmem>>, vector<1x128xf32>
    %4 = vector.broadcast %3 : vector<1x128xf32> to vector<32x128xf32>
    %5 = arith.addf %2, %4 : vector<32x128xf32>
    %6 = arith.truncf %5 : vector<32x128xf32> to vector<32x128xbf16>
    %c0_5 = arith.constant 0 : index
    %c0_6 = arith.constant 0 : index
    %7 = vector.load %arg5[%c0_5, %c0_6] : memref<32x128xbf16, #tpu.memory_space<vmem>>, vector<32x128xbf16>
    tpu.vector_store %arg5[%c0_5, %c0_6], %6 {strides = array<i32>} : memref<32x128xbf16, #tpu.memory_space<vmem>>, vector<32x128xbf16>,
    return
  }
  func.func @transform_0(%arg0: i32, %arg1: i32) -> (i32, i32) {
    %c0_i32 = arith.constant 0 : i32
    %c0_i32_0 = arith.constant 0 : i32
    return %arg0, %c0_i32 : i32, i32
  }
  func.func @transform_1(%arg0: i32, %arg1: i32) -> (i32, i32) {
    %c0_i32 = arith.constant 0 : i32
    %c0_i32_0 = arith.constant 0 : i32
    return %c0_i32, %arg1 : i32, i32
  }
  func.func @transform_2(%arg0: i32, %arg1: i32) -> (i32, i32) {
    %c0_i32 = arith.constant 0 : i32
    %c0_i32_0 = arith.constant 0 : i32
    return %c0_i32, %arg1 : i32, i32
  }
  func.func @transform_3(%arg0: i32, %arg1: i32) -> (i32, i32) {
    %c0_i32 = arith.constant 0 : i32
    return %arg0, %arg1 : i32, i32
  }
}

module attributes {stable_mosaic.version = 11 : i64} {
  func.func @_lstm_recurrence_kernel(%arg0: i32, %arg1: i32, %arg2: memref<4x8x128xf32, #tpu.memory_space<vmem>>, %arg3: memref<32x128xbf16, #tpu.memory_space<vmem>>, %arg4: memref<4x8x32xbf16, #tpu.memory_space<vmem>>, %arg5: memref<4x32xf32, #tpu.memory_space<vmem>>, %arg6: memref<4x32xf32, #tpu.memory_space<vmem>>) attributes {dimension_semantics = [#tpu.dimension_semantics<parallel>, #tpu.dimension_semantics<arbitrary>], iteration_bounds = array<i64: 1, 1>, scalar_prefetch = 0 : i64, scratch_operands = 2 : i64, tpu.core_type = #tpu.core_type<tc>, window_params = [{transform_indices = @transform_0, window_bounds = array<i64: 4, 8, 128>}, {pipeline_mode = #tpu.pipeline_mode<synchronous>, transform_indices = @transform_1, window_bounds = array<i64: 32, 128>}, {transform_indices = @transform_2, window_bounds = array<i64: 4, 8, 32>}]} {
    %c0_i32 = arith.constant 0 : i32
    %0 = arith.cmpi eq, %arg1, %c0_i32 : i32
    %1 = arith.extui %0 : i1 to i32
    %c0_i32_0 = arith.constant 0 : i32
    %2 = arith.cmpi ne, %1, %c0_i32_0 : i32
    scf.if %2 {
      %cst_152 = arith.constant 0.000000e+00 : f32
      %315 = vector.broadcast %cst_152 : f32 to vector<4x32xf32>
      %c0_153 = arith.constant 0 : index
      %c0_154 = arith.constant 0 : index
      %316 = vector.load %arg5[%c0_153, %c0_154] : memref<4x32xf32, #tpu.memory_space<vmem>>, vector<4x32xf32>
      tpu.vector_store %arg5[%c0_153, %c0_154], %315 {strides = array<i32>} : memref<4x32xf32, #tpu.memory_space<vmem>>, vector<4x32xf32>,
      %cst_155 = arith.constant 0.000000e+00 : f32
      %317 = vector.broadcast %cst_155 : f32 to vector<4x32xf32>
      %c0_156 = arith.constant 0 : index
      %c0_157 = arith.constant 0 : index
      %318 = vector.load %arg6[%c0_156, %c0_157] : memref<4x32xf32, #tpu.memory_space<vmem>>, vector<4x32xf32>
      tpu.vector_store %arg6[%c0_156, %c0_157], %317 {strides = array<i32>} : memref<4x32xf32, #tpu.memory_space<vmem>>, vector<4x32xf32>,
    } else {
    }
    %c0 = arith.constant 0 : index
    %c0_1 = arith.constant 0 : index
    %3 = vector.load %arg5[%c0, %c0_1] : memref<4x32xf32, #tpu.memory_space<vmem>>, vector<4x32xf32>
    %4 = arith.truncf %3 : vector<4x32xf32> to vector<4x32xbf16>
    %c0_2 = arith.constant 0 : index
    %c0_3 = arith.constant 0 : index
    %c0_4 = arith.constant 0 : index
    %5 = vector.load %arg2[%c0_2, %c0_3, %c0_4] : memref<4x8x128xf32, #tpu.memory_space<vmem>>, vector<4x1x128xf32>
    %6 = vector.shape_cast %5 : vector<4x1x128xf32> to vector<4x128xf32>
    %c0_5 = arith.constant 0 : index
    %c0_6 = arith.constant 0 : index
    %7 = vector.load %arg3[%c0_5, %c0_6] : memref<32x128xbf16, #tpu.memory_space<vmem>>, vector<32x128xbf16>
    %cst = arith.constant dense<0.000000e+00> : vector<4x128xf32>
    %8 = tpu.matmul %4, %7, %cst {dimension_numbers = #tpu.dot_dimension_numbers<[1], [0], [0], [1], [0, 0, 1, 1], [], []>} : vector<4x32xbf16>, vector<32x128xbf16>, vector<4x128xf32> -> vector<4x128xf32>
    %9 = arith.addf %6, %8 : vector<4x128xf32>
    %10 = vector.extract_strided_slice %9 {offsets = [0, 0], sizes = [4, 32], strides = [1, 1]} : vector<4x128xf32> to vector<4x32xf32>
    %11 = arith.negf %10 : vector<4x32xf32>
    %12 = math.exp %11 : vector<4x32xf32>
    %cst_7 = arith.constant 1.000000e+00 : f32
    %13 = vector.broadcast %cst_7 : f32 to vector<4x32xf32>
    %14 = arith.addf %13, %12 : vector<4x32xf32>
    %15 = arith.divf %13, %14 : vector<4x32xf32>
    %16 = vector.extract_strided_slice %9 {offsets = [0, 32], sizes = [4, 32], strides = [1, 1]} : vector<4x128xf32> to vector<4x32xf32>
    %17 = arith.negf %16 : vector<4x32xf32>
    %18 = math.exp %17 : vector<4x32xf32>
    %cst_8 = arith.constant 1.000000e+00 : f32
    %19 = vector.broadcast %cst_8 : f32 to vector<4x32xf32>
    %20 = arith.addf %19, %18 : vector<4x32xf32>
    %21 = arith.divf %19, %20 : vector<4x32xf32>
    %22 = vector.extract_strided_slice %9 {offsets = [0, 64], sizes = [4, 32], strides = [1, 1]} : vector<4x128xf32> to vector<4x32xf32>
    %23 = math.tanh %22 : vector<4x32xf32>
    %24 = vector.extract_strided_slice %9 {offsets = [0, 96], sizes = [4, 32], strides = [1, 1]} : vector<4x128xf32> to vector<4x32xf32>
    %25 = arith.negf %24 : vector<4x32xf32>
    %26 = math.exp %25 : vector<4x32xf32>
    %cst_9 = arith.constant 1.000000e+00 : f32
    %27 = vector.broadcast %cst_9 : f32 to vector<4x32xf32>
    %28 = arith.addf %27, %26 : vector<4x32xf32>
    %29 = arith.divf %27, %28 : vector<4x32xf32>
    %c0_10 = arith.constant 0 : index
    %c0_11 = arith.constant 0 : index
    %30 = vector.load %arg6[%c0_10, %c0_11] : memref<4x32xf32, #tpu.memory_space<vmem>>, vector<4x32xf32>
    %31 = arith.mulf %21, %30 : vector<4x32xf32>
    %32 = arith.mulf %15, %23 : vector<4x32xf32>
    %33 = arith.addf %31, %32 : vector<4x32xf32>
    %34 = math.tanh %33 : vector<4x32xf32>
    %35 = arith.mulf %29, %34 : vector<4x32xf32>
    %c0_12 = arith.constant 0 : index
    %c0_13 = arith.constant 0 : index
    %36 = vector.load %arg6[%c0_12, %c0_13] : memref<4x32xf32, #tpu.memory_space<vmem>>, vector<4x32xf32>
    tpu.vector_store %arg6[%c0_12, %c0_13], %33 {strides = array<i32>} : memref<4x32xf32, #tpu.memory_space<vmem>>, vector<4x32xf32>,
    %c0_14 = arith.constant 0 : index
    %c0_15 = arith.constant 0 : index
    %37 = vector.load %arg5[%c0_14, %c0_15] : memref<4x32xf32, #tpu.memory_space<vmem>>, vector<4x32xf32>
    tpu.vector_store %arg5[%c0_14, %c0_15], %35 {strides = array<i32>} : memref<4x32xf32, #tpu.memory_space<vmem>>, vector<4x32xf32>,
    %38 = arith.truncf %35 : vector<4x32xf32> to vector<4x32xbf16>
    %c0_16 = arith.constant 0 : index
    %c0_17 = arith.constant 0 : index
    %c0_18 = arith.constant 0 : index
    %39 = vector.load %arg4[%c0_16, %c0_17, %c0_18] : memref<4x8x32xbf16, #tpu.memory_space<vmem>>, vector<4x1x32xbf16>
    %40 = vector.shape_cast %39 : vector<4x1x32xbf16> to vector<4x32xbf16>
    %41 = vector.shape_cast %38 : vector<4x32xbf16> to vector<4x1x32xbf16>
    tpu.vector_store %arg4[%c0_16, %c0_17, %c0_18], %41 {strides = array<i32>} : memref<4x8x32xbf16, #tpu.memory_space<vmem>>, vector<4x1x32xbf16>,
    %c0_19 = arith.constant 0 : index
    %c0_20 = arith.constant 0 : index
    %42 = vector.load %arg5[%c0_19, %c0_20] : memref<4x32xf32, #tpu.memory_space<vmem>>, vector<4x32xf32>
    %43 = arith.truncf %42 : vector<4x32xf32> to vector<4x32xbf16>
    %c0_21 = arith.constant 0 : index
    %c1 = arith.constant 1 : index
    %c0_22 = arith.constant 0 : index
    %44 = vector.load %arg2[%c0_21, %c1, %c0_22] : memref<4x8x128xf32, #tpu.memory_space<vmem>>, vector<4x1x128xf32>
    %45 = vector.shape_cast %44 : vector<4x1x128xf32> to vector<4x128xf32>
    %c0_23 = arith.constant 0 : index
    %c0_24 = arith.constant 0 : index
    %46 = vector.load %arg3[%c0_23, %c0_24] : memref<32x128xbf16, #tpu.memory_space<vmem>>, vector<32x128xbf16>
    %cst_25 = arith.constant dense<0.000000e+00> : vector<4x128xf32>
    %47 = tpu.matmul %43, %46, %cst_25 {dimension_numbers = #tpu.dot_dimension_numbers<[1], [0], [0], [1], [0, 0, 1, 1], [], []>} : vector<4x32xbf16>, vector<32x128xbf16>, vector<4x128xf32> -> vector<4x128xf32>
    %48 = arith.addf %45, %47 : vector<4x128xf32>
    %49 = vector.extract_strided_slice %48 {offsets = [0, 0], sizes = [4, 32], strides = [1, 1]} : vector<4x128xf32> to vector<4x32xf32>
    %50 = arith.negf %49 : vector<4x32xf32>
    %51 = math.exp %50 : vector<4x32xf32>
    %cst_26 = arith.constant 1.000000e+00 : f32
    %52 = vector.broadcast %cst_26 : f32 to vector<4x32xf32>
    %53 = arith.addf %52, %51 : vector<4x32xf32>
    %54 = arith.divf %52, %53 : vector<4x32xf32>
    %55 = vector.extract_strided_slice %48 {offsets = [0, 32], sizes = [4, 32], strides = [1, 1]} : vector<4x128xf32> to vector<4x32xf32>
    %56 = arith.negf %55 : vector<4x32xf32>
    %57 = math.exp %56 : vector<4x32xf32>
    %cst_27 = arith.constant 1.000000e+00 : f32
    %58 = vector.broadcast %cst_27 : f32 to vector<4x32xf32>
    %59 = arith.addf %58, %57 : vector<4x32xf32>
    %60 = arith.divf %58, %59 : vector<4x32xf32>
    %61 = vector.extract_strided_slice %48 {offsets = [0, 64], sizes = [4, 32], strides = [1, 1]} : vector<4x128xf32> to vector<4x32xf32>
    %62 = math.tanh %61 : vector<4x32xf32>
    %63 = vector.extract_strided_slice %48 {offsets = [0, 96], sizes = [4, 32], strides = [1, 1]} : vector<4x128xf32> to vector<4x32xf32>
    %64 = arith.negf %63 : vector<4x32xf32>
    %65 = math.exp %64 : vector<4x32xf32>
    %cst_28 = arith.constant 1.000000e+00 : f32
    %66 = vector.broadcast %cst_28 : f32 to vector<4x32xf32>
    %67 = arith.addf %66, %65 : vector<4x32xf32>
    %68 = arith.divf %66, %67 : vector<4x32xf32>
    %c0_29 = arith.constant 0 : index
    %c0_30 = arith.constant 0 : index
    %69 = vector.load %arg6[%c0_29, %c0_30] : memref<4x32xf32, #tpu.memory_space<vmem>>, vector<4x32xf32>
    %70 = arith.mulf %60, %69 : vector<4x32xf32>
    %71 = arith.mulf %54, %62 : vector<4x32xf32>
    %72 = arith.addf %70, %71 : vector<4x32xf32>
    %73 = math.tanh %72 : vector<4x32xf32>
    %74 = arith.mulf %68, %73 : vector<4x32xf32>
    %c0_31 = arith.constant 0 : index
    %c0_32 = arith.constant 0 : index
    %75 = vector.load %arg6[%c0_31, %c0_32] : memref<4x32xf32, #tpu.memory_space<vmem>>, vector<4x32xf32>
    tpu.vector_store %arg6[%c0_31, %c0_32], %72 {strides = array<i32>} : memref<4x32xf32, #tpu.memory_space<vmem>>, vector<4x32xf32>,
    %c0_33 = arith.constant 0 : index
    %c0_34 = arith.constant 0 : index
    %76 = vector.load %arg5[%c0_33, %c0_34] : memref<4x32xf32, #tpu.memory_space<vmem>>, vector<4x32xf32>
    tpu.vector_store %arg5[%c0_33, %c0_34], %74 {strides = array<i32>} : memref<4x32xf32, #tpu.memory_space<vmem>>, vector<4x32xf32>,
    %77 = arith.truncf %74 : vector<4x32xf32> to vector<4x32xbf16>
    %c0_35 = arith.constant 0 : index
    %c1_36 = arith.constant 1 : index
    %c0_37 = arith.constant 0 : index
    %78 = vector.load %arg4[%c0_35, %c1_36, %c0_37] : memref<4x8x32xbf16, #tpu.memory_space<vmem>>, vector<4x1x32xbf16>
    %79 = vector.shape_cast %78 : vector<4x1x32xbf16> to vector<4x32xbf16>
    %80 = vector.shape_cast %77 : vector<4x32xbf16> to vector<4x1x32xbf16>
    tpu.vector_store %arg4[%c0_35, %c1_36, %c0_37], %80 {strides = array<i32>} : memref<4x8x32xbf16, #tpu.memory_space<vmem>>, vector<4x1x32xbf16>,
    %c0_38 = arith.constant 0 : index
    %c0_39 = arith.constant 0 : index
    %81 = vector.load %arg5[%c0_38, %c0_39] : memref<4x32xf32, #tpu.memory_space<vmem>>, vector<4x32xf32>
    %82 = arith.truncf %81 : vector<4x32xf32> to vector<4x32xbf16>
    %c0_40 = arith.constant 0 : index
    %c2 = arith.constant 2 : index
    %c0_41 = arith.constant 0 : index
    %83 = vector.load %arg2[%c0_40, %c2, %c0_41] : memref<4x8x128xf32, #tpu.memory_space<vmem>>, vector<4x1x128xf32>
    %84 = vector.shape_cast %83 : vector<4x1x128xf32> to vector<4x128xf32>
    %c0_42 = arith.constant 0 : index
    %c0_43 = arith.constant 0 : index
    %85 = vector.load %arg3[%c0_42, %c0_43] : memref<32x128xbf16, #tpu.memory_space<vmem>>, vector<32x128xbf16>
    %cst_44 = arith.constant dense<0.000000e+00> : vector<4x128xf32>
    %86 = tpu.matmul %82, %85, %cst_44 {dimension_numbers = #tpu.dot_dimension_numbers<[1], [0], [0], [1], [0, 0, 1, 1], [], []>} : vector<4x32xbf16>, vector<32x128xbf16>, vector<4x128xf32> -> vector<4x128xf32>
    %87 = arith.addf %84, %86 : vector<4x128xf32>
    %88 = vector.extract_strided_slice %87 {offsets = [0, 0], sizes = [4, 32], strides = [1, 1]} : vector<4x128xf32> to vector<4x32xf32>
    %89 = arith.negf %88 : vector<4x32xf32>
    %90 = math.exp %89 : vector<4x32xf32>
    %cst_45 = arith.constant 1.000000e+00 : f32
    %91 = vector.broadcast %cst_45 : f32 to vector<4x32xf32>
    %92 = arith.addf %91, %90 : vector<4x32xf32>
    %93 = arith.divf %91, %92 : vector<4x32xf32>
    %94 = vector.extract_strided_slice %87 {offsets = [0, 32], sizes = [4, 32], strides = [1, 1]} : vector<4x128xf32> to vector<4x32xf32>
    %95 = arith.negf %94 : vector<4x32xf32>
    %96 = math.exp %95 : vector<4x32xf32>
    %cst_46 = arith.constant 1.000000e+00 : f32
    %97 = vector.broadcast %cst_46 : f32 to vector<4x32xf32>
    %98 = arith.addf %97, %96 : vector<4x32xf32>
    %99 = arith.divf %97, %98 : vector<4x32xf32>
    %100 = vector.extract_strided_slice %87 {offsets = [0, 64], sizes = [4, 32], strides = [1, 1]} : vector<4x128xf32> to vector<4x32xf32>
    %101 = math.tanh %100 : vector<4x32xf32>
    %102 = vector.extract_strided_slice %87 {offsets = [0, 96], sizes = [4, 32], strides = [1, 1]} : vector<4x128xf32> to vector<4x32xf32>
    %103 = arith.negf %102 : vector<4x32xf32>
    %104 = math.exp %103 : vector<4x32xf32>
    %cst_47 = arith.constant 1.000000e+00 : f32
    %105 = vector.broadcast %cst_47 : f32 to vector<4x32xf32>
    %106 = arith.addf %105, %104 : vector<4x32xf32>
    %107 = arith.divf %105, %106 : vector<4x32xf32>
    %c0_48 = arith.constant 0 : index
    %c0_49 = arith.constant 0 : index
    %108 = vector.load %arg6[%c0_48, %c0_49] : memref<4x32xf32, #tpu.memory_space<vmem>>, vector<4x32xf32>
    %109 = arith.mulf %99, %108 : vector<4x32xf32>
    %110 = arith.mulf %93, %101 : vector<4x32xf32>
    %111 = arith.addf %109, %110 : vector<4x32xf32>
    %112 = math.tanh %111 : vector<4x32xf32>
    %113 = arith.mulf %107, %112 : vector<4x32xf32>
    %c0_50 = arith.constant 0 : index
    %c0_51 = arith.constant 0 : index
    %114 = vector.load %arg6[%c0_50, %c0_51] : memref<4x32xf32, #tpu.memory_space<vmem>>, vector<4x32xf32>
    tpu.vector_store %arg6[%c0_50, %c0_51], %111 {strides = array<i32>} : memref<4x32xf32, #tpu.memory_space<vmem>>, vector<4x32xf32>,
    %c0_52 = arith.constant 0 : index
    %c0_53 = arith.constant 0 : index
    %115 = vector.load %arg5[%c0_52, %c0_53] : memref<4x32xf32, #tpu.memory_space<vmem>>, vector<4x32xf32>
    tpu.vector_store %arg5[%c0_52, %c0_53], %113 {strides = array<i32>} : memref<4x32xf32, #tpu.memory_space<vmem>>, vector<4x32xf32>,
    %116 = arith.truncf %113 : vector<4x32xf32> to vector<4x32xbf16>
    %c0_54 = arith.constant 0 : index
    %c2_55 = arith.constant 2 : index
    %c0_56 = arith.constant 0 : index
    %117 = vector.load %arg4[%c0_54, %c2_55, %c0_56] : memref<4x8x32xbf16, #tpu.memory_space<vmem>>, vector<4x1x32xbf16>
    %118 = vector.shape_cast %117 : vector<4x1x32xbf16> to vector<4x32xbf16>
    %119 = vector.shape_cast %116 : vector<4x32xbf16> to vector<4x1x32xbf16>
    tpu.vector_store %arg4[%c0_54, %c2_55, %c0_56], %119 {strides = array<i32>} : memref<4x8x32xbf16, #tpu.memory_space<vmem>>, vector<4x1x32xbf16>,
    %c0_57 = arith.constant 0 : index
    %c0_58 = arith.constant 0 : index
    %120 = vector.load %arg5[%c0_57, %c0_58] : memref<4x32xf32, #tpu.memory_space<vmem>>, vector<4x32xf32>
    %121 = arith.truncf %120 : vector<4x32xf32> to vector<4x32xbf16>
    %c0_59 = arith.constant 0 : index
    %c3 = arith.constant 3 : index
    %c0_60 = arith.constant 0 : index
    %122 = vector.load %arg2[%c0_59, %c3, %c0_60] : memref<4x8x128xf32, #tpu.memory_space<vmem>>, vector<4x1x128xf32>
    %123 = vector.shape_cast %122 : vector<4x1x128xf32> to vector<4x128xf32>
    %c0_61 = arith.constant 0 : index
    %c0_62 = arith.constant 0 : index
    %124 = vector.load %arg3[%c0_61, %c0_62] : memref<32x128xbf16, #tpu.memory_space<vmem>>, vector<32x128xbf16>
    %cst_63 = arith.constant dense<0.000000e+00> : vector<4x128xf32>
    %125 = tpu.matmul %121, %124, %cst_63 {dimension_numbers = #tpu.dot_dimension_numbers<[1], [0], [0], [1], [0, 0, 1, 1], [], []>} : vector<4x32xbf16>, vector<32x128xbf16>, vector<4x128xf32> -> vector<4x128xf32>
    %126 = arith.addf %123, %125 : vector<4x128xf32>
    %127 = vector.extract_strided_slice %126 {offsets = [0, 0], sizes = [4, 32], strides = [1, 1]} : vector<4x128xf32> to vector<4x32xf32>
    %128 = arith.negf %127 : vector<4x32xf32>
    %129 = math.exp %128 : vector<4x32xf32>
    %cst_64 = arith.constant 1.000000e+00 : f32
    %130 = vector.broadcast %cst_64 : f32 to vector<4x32xf32>
    %131 = arith.addf %130, %129 : vector<4x32xf32>
    %132 = arith.divf %130, %131 : vector<4x32xf32>
    %133 = vector.extract_strided_slice %126 {offsets = [0, 32], sizes = [4, 32], strides = [1, 1]} : vector<4x128xf32> to vector<4x32xf32>
    %134 = arith.negf %133 : vector<4x32xf32>
    %135 = math.exp %134 : vector<4x32xf32>
    %cst_65 = arith.constant 1.000000e+00 : f32
    %136 = vector.broadcast %cst_65 : f32 to vector<4x32xf32>
    %137 = arith.addf %136, %135 : vector<4x32xf32>
    %138 = arith.divf %136, %137 : vector<4x32xf32>
    %139 = vector.extract_strided_slice %126 {offsets = [0, 64], sizes = [4, 32], strides = [1, 1]} : vector<4x128xf32> to vector<4x32xf32>
    %140 = math.tanh %139 : vector<4x32xf32>
    %141 = vector.extract_strided_slice %126 {offsets = [0, 96], sizes = [4, 32], strides = [1, 1]} : vector<4x128xf32> to vector<4x32xf32>
    %142 = arith.negf %141 : vector<4x32xf32>
    %143 = math.exp %142 : vector<4x32xf32>
    %cst_66 = arith.constant 1.000000e+00 : f32
    %144 = vector.broadcast %cst_66 : f32 to vector<4x32xf32>
    %145 = arith.addf %144, %143 : vector<4x32xf32>
    %146 = arith.divf %144, %145 : vector<4x32xf32>
    %c0_67 = arith.constant 0 : index
    %c0_68 = arith.constant 0 : index
    %147 = vector.load %arg6[%c0_67, %c0_68] : memref<4x32xf32, #tpu.memory_space<vmem>>, vector<4x32xf32>
    %148 = arith.mulf %138, %147 : vector<4x32xf32>
    %149 = arith.mulf %132, %140 : vector<4x32xf32>
    %150 = arith.addf %148, %149 : vector<4x32xf32>
    %151 = math.tanh %150 : vector<4x32xf32>
    %152 = arith.mulf %146, %151 : vector<4x32xf32>
    %c0_69 = arith.constant 0 : index
    %c0_70 = arith.constant 0 : index
    %153 = vector.load %arg6[%c0_69, %c0_70] : memref<4x32xf32, #tpu.memory_space<vmem>>, vector<4x32xf32>
    tpu.vector_store %arg6[%c0_69, %c0_70], %150 {strides = array<i32>} : memref<4x32xf32, #tpu.memory_space<vmem>>, vector<4x32xf32>,
    %c0_71 = arith.constant 0 : index
    %c0_72 = arith.constant 0 : index
    %154 = vector.load %arg5[%c0_71, %c0_72] : memref<4x32xf32, #tpu.memory_space<vmem>>, vector<4x32xf32>
    tpu.vector_store %arg5[%c0_71, %c0_72], %152 {strides = array<i32>} : memref<4x32xf32, #tpu.memory_space<vmem>>, vector<4x32xf32>,
    %155 = arith.truncf %152 : vector<4x32xf32> to vector<4x32xbf16>
    %c0_73 = arith.constant 0 : index
    %c3_74 = arith.constant 3 : index
    %c0_75 = arith.constant 0 : index
    %156 = vector.load %arg4[%c0_73, %c3_74, %c0_75] : memref<4x8x32xbf16, #tpu.memory_space<vmem>>, vector<4x1x32xbf16>
    %157 = vector.shape_cast %156 : vector<4x1x32xbf16> to vector<4x32xbf16>
    %158 = vector.shape_cast %155 : vector<4x32xbf16> to vector<4x1x32xbf16>
    tpu.vector_store %arg4[%c0_73, %c3_74, %c0_75], %158 {strides = array<i32>} : memref<4x8x32xbf16, #tpu.memory_space<vmem>>, vector<4x1x32xbf16>,
    %c0_76 = arith.constant 0 : index
    %c0_77 = arith.constant 0 : index
    %159 = vector.load %arg5[%c0_76, %c0_77] : memref<4x32xf32, #tpu.memory_space<vmem>>, vector<4x32xf32>
    %160 = arith.truncf %159 : vector<4x32xf32> to vector<4x32xbf16>
    %c0_78 = arith.constant 0 : index
    %c4 = arith.constant 4 : index
    %c0_79 = arith.constant 0 : index
    %161 = vector.load %arg2[%c0_78, %c4, %c0_79] : memref<4x8x128xf32, #tpu.memory_space<vmem>>, vector<4x1x128xf32>
    %162 = vector.shape_cast %161 : vector<4x1x128xf32> to vector<4x128xf32>
    %c0_80 = arith.constant 0 : index
    %c0_81 = arith.constant 0 : index
    %163 = vector.load %arg3[%c0_80, %c0_81] : memref<32x128xbf16, #tpu.memory_space<vmem>>, vector<32x128xbf16>
    %cst_82 = arith.constant dense<0.000000e+00> : vector<4x128xf32>
    %164 = tpu.matmul %160, %163, %cst_82 {dimension_numbers = #tpu.dot_dimension_numbers<[1], [0], [0], [1], [0, 0, 1, 1], [], []>} : vector<4x32xbf16>, vector<32x128xbf16>, vector<4x128xf32> -> vector<4x128xf32>
    %165 = arith.addf %162, %164 : vector<4x128xf32>
    %166 = vector.extract_strided_slice %165 {offsets = [0, 0], sizes = [4, 32], strides = [1, 1]} : vector<4x128xf32> to vector<4x32xf32>
    %167 = arith.negf %166 : vector<4x32xf32>
    %168 = math.exp %167 : vector<4x32xf32>
    %cst_83 = arith.constant 1.000000e+00 : f32
    %169 = vector.broadcast %cst_83 : f32 to vector<4x32xf32>
    %170 = arith.addf %169, %168 : vector<4x32xf32>
    %171 = arith.divf %169, %170 : vector<4x32xf32>
    %172 = vector.extract_strided_slice %165 {offsets = [0, 32], sizes = [4, 32], strides = [1, 1]} : vector<4x128xf32> to vector<4x32xf32>
    %173 = arith.negf %172 : vector<4x32xf32>
    %174 = math.exp %173 : vector<4x32xf32>
    %cst_84 = arith.constant 1.000000e+00 : f32
    %175 = vector.broadcast %cst_84 : f32 to vector<4x32xf32>
    %176 = arith.addf %175, %174 : vector<4x32xf32>
    %177 = arith.divf %175, %176 : vector<4x32xf32>
    %178 = vector.extract_strided_slice %165 {offsets = [0, 64], sizes = [4, 32], strides = [1, 1]} : vector<4x128xf32> to vector<4x32xf32>
    %179 = math.tanh %178 : vector<4x32xf32>
    %180 = vector.extract_strided_slice %165 {offsets = [0, 96], sizes = [4, 32], strides = [1, 1]} : vector<4x128xf32> to vector<4x32xf32>
    %181 = arith.negf %180 : vector<4x32xf32>
    %182 = math.exp %181 : vector<4x32xf32>
    %cst_85 = arith.constant 1.000000e+00 : f32
    %183 = vector.broadcast %cst_85 : f32 to vector<4x32xf32>
    %184 = arith.addf %183, %182 : vector<4x32xf32>
    %185 = arith.divf %183, %184 : vector<4x32xf32>
    %c0_86 = arith.constant 0 : index
    %c0_87 = arith.constant 0 : index
    %186 = vector.load %arg6[%c0_86, %c0_87] : memref<4x32xf32, #tpu.memory_space<vmem>>, vector<4x32xf32>
    %187 = arith.mulf %177, %186 : vector<4x32xf32>
    %188 = arith.mulf %171, %179 : vector<4x32xf32>
    %189 = arith.addf %187, %188 : vector<4x32xf32>
    %190 = math.tanh %189 : vector<4x32xf32>
    %191 = arith.mulf %185, %190 : vector<4x32xf32>
    %c0_88 = arith.constant 0 : index
    %c0_89 = arith.constant 0 : index
    %192 = vector.load %arg6[%c0_88, %c0_89] : memref<4x32xf32, #tpu.memory_space<vmem>>, vector<4x32xf32>
    tpu.vector_store %arg6[%c0_88, %c0_89], %189 {strides = array<i32>} : memref<4x32xf32, #tpu.memory_space<vmem>>, vector<4x32xf32>,
    %c0_90 = arith.constant 0 : index
    %c0_91 = arith.constant 0 : index
    %193 = vector.load %arg5[%c0_90, %c0_91] : memref<4x32xf32, #tpu.memory_space<vmem>>, vector<4x32xf32>
    tpu.vector_store %arg5[%c0_90, %c0_91], %191 {strides = array<i32>} : memref<4x32xf32, #tpu.memory_space<vmem>>, vector<4x32xf32>,
    %194 = arith.truncf %191 : vector<4x32xf32> to vector<4x32xbf16>
    %c0_92 = arith.constant 0 : index
    %c4_93 = arith.constant 4 : index
    %c0_94 = arith.constant 0 : index
    %195 = vector.load %arg4[%c0_92, %c4_93, %c0_94] : memref<4x8x32xbf16, #tpu.memory_space<vmem>>, vector<4x1x32xbf16>
    %196 = vector.shape_cast %195 : vector<4x1x32xbf16> to vector<4x32xbf16>
    %197 = vector.shape_cast %194 : vector<4x32xbf16> to vector<4x1x32xbf16>
    tpu.vector_store %arg4[%c0_92, %c4_93, %c0_94], %197 {strides = array<i32>} : memref<4x8x32xbf16, #tpu.memory_space<vmem>>, vector<4x1x32xbf16>,
    %c0_95 = arith.constant 0 : index
    %c0_96 = arith.constant 0 : index
    %198 = vector.load %arg5[%c0_95, %c0_96] : memref<4x32xf32, #tpu.memory_space<vmem>>, vector<4x32xf32>
    %199 = arith.truncf %198 : vector<4x32xf32> to vector<4x32xbf16>
    %c0_97 = arith.constant 0 : index
    %c5 = arith.constant 5 : index
    %c0_98 = arith.constant 0 : index
    %200 = vector.load %arg2[%c0_97, %c5, %c0_98] : memref<4x8x128xf32, #tpu.memory_space<vmem>>, vector<4x1x128xf32>
    %201 = vector.shape_cast %200 : vector<4x1x128xf32> to vector<4x128xf32>
    %c0_99 = arith.constant 0 : index
    %c0_100 = arith.constant 0 : index
    %202 = vector.load %arg3[%c0_99, %c0_100] : memref<32x128xbf16, #tpu.memory_space<vmem>>, vector<32x128xbf16>
    %cst_101 = arith.constant dense<0.000000e+00> : vector<4x128xf32>
    %203 = tpu.matmul %199, %202, %cst_101 {dimension_numbers = #tpu.dot_dimension_numbers<[1], [0], [0], [1], [0, 0, 1, 1], [], []>} : vector<4x32xbf16>, vector<32x128xbf16>, vector<4x128xf32> -> vector<4x128xf32>
    %204 = arith.addf %201, %203 : vector<4x128xf32>
    %205 = vector.extract_strided_slice %204 {offsets = [0, 0], sizes = [4, 32], strides = [1, 1]} : vector<4x128xf32> to vector<4x32xf32>
    %206 = arith.negf %205 : vector<4x32xf32>
    %207 = math.exp %206 : vector<4x32xf32>
    %cst_102 = arith.constant 1.000000e+00 : f32
    %208 = vector.broadcast %cst_102 : f32 to vector<4x32xf32>
    %209 = arith.addf %208, %207 : vector<4x32xf32>
    %210 = arith.divf %208, %209 : vector<4x32xf32>
    %211 = vector.extract_strided_slice %204 {offsets = [0, 32], sizes = [4, 32], strides = [1, 1]} : vector<4x128xf32> to vector<4x32xf32>
    %212 = arith.negf %211 : vector<4x32xf32>
    %213 = math.exp %212 : vector<4x32xf32>
    %cst_103 = arith.constant 1.000000e+00 : f32
    %214 = vector.broadcast %cst_103 : f32 to vector<4x32xf32>
    %215 = arith.addf %214, %213 : vector<4x32xf32>
    %216 = arith.divf %214, %215 : vector<4x32xf32>
    %217 = vector.extract_strided_slice %204 {offsets = [0, 64], sizes = [4, 32], strides = [1, 1]} : vector<4x128xf32> to vector<4x32xf32>
    %218 = math.tanh %217 : vector<4x32xf32>
    %219 = vector.extract_strided_slice %204 {offsets = [0, 96], sizes = [4, 32], strides = [1, 1]} : vector<4x128xf32> to vector<4x32xf32>
    %220 = arith.negf %219 : vector<4x32xf32>
    %221 = math.exp %220 : vector<4x32xf32>
    %cst_104 = arith.constant 1.000000e+00 : f32
    %222 = vector.broadcast %cst_104 : f32 to vector<4x32xf32>
    %223 = arith.addf %222, %221 : vector<4x32xf32>
    %224 = arith.divf %222, %223 : vector<4x32xf32>
    %c0_105 = arith.constant 0 : index
    %c0_106 = arith.constant 0 : index
    %225 = vector.load %arg6[%c0_105, %c0_106] : memref<4x32xf32, #tpu.memory_space<vmem>>, vector<4x32xf32>
    %226 = arith.mulf %216, %225 : vector<4x32xf32>
    %227 = arith.mulf %210, %218 : vector<4x32xf32>
    %228 = arith.addf %226, %227 : vector<4x32xf32>
    %229 = math.tanh %228 : vector<4x32xf32>
    %230 = arith.mulf %224, %229 : vector<4x32xf32>
    %c0_107 = arith.constant 0 : index
    %c0_108 = arith.constant 0 : index
    %231 = vector.load %arg6[%c0_107, %c0_108] : memref<4x32xf32, #tpu.memory_space<vmem>>, vector<4x32xf32>
    tpu.vector_store %arg6[%c0_107, %c0_108], %228 {strides = array<i32>} : memref<4x32xf32, #tpu.memory_space<vmem>>, vector<4x32xf32>,
    %c0_109 = arith.constant 0 : index
    %c0_110 = arith.constant 0 : index
    %232 = vector.load %arg5[%c0_109, %c0_110] : memref<4x32xf32, #tpu.memory_space<vmem>>, vector<4x32xf32>
    tpu.vector_store %arg5[%c0_109, %c0_110], %230 {strides = array<i32>} : memref<4x32xf32, #tpu.memory_space<vmem>>, vector<4x32xf32>,
    %233 = arith.truncf %230 : vector<4x32xf32> to vector<4x32xbf16>
    %c0_111 = arith.constant 0 : index
    %c5_112 = arith.constant 5 : index
    %c0_113 = arith.constant 0 : index
    %234 = vector.load %arg4[%c0_111, %c5_112, %c0_113] : memref<4x8x32xbf16, #tpu.memory_space<vmem>>, vector<4x1x32xbf16>
    %235 = vector.shape_cast %234 : vector<4x1x32xbf16> to vector<4x32xbf16>
    %236 = vector.shape_cast %233 : vector<4x32xbf16> to vector<4x1x32xbf16>
    tpu.vector_store %arg4[%c0_111, %c5_112, %c0_113], %236 {strides = array<i32>} : memref<4x8x32xbf16, #tpu.memory_space<vmem>>, vector<4x1x32xbf16>,
    %c0_114 = arith.constant 0 : index
    %c0_115 = arith.constant 0 : index
    %237 = vector.load %arg5[%c0_114, %c0_115] : memref<4x32xf32, #tpu.memory_space<vmem>>, vector<4x32xf32>
    %238 = arith.truncf %237 : vector<4x32xf32> to vector<4x32xbf16>
    %c0_116 = arith.constant 0 : index
    %c6 = arith.constant 6 : index
    %c0_117 = arith.constant 0 : index
    %239 = vector.load %arg2[%c0_116, %c6, %c0_117] : memref<4x8x128xf32, #tpu.memory_space<vmem>>, vector<4x1x128xf32>
    %240 = vector.shape_cast %239 : vector<4x1x128xf32> to vector<4x128xf32>
    %c0_118 = arith.constant 0 : index
    %c0_119 = arith.constant 0 : index
    %241 = vector.load %arg3[%c0_118, %c0_119] : memref<32x128xbf16, #tpu.memory_space<vmem>>, vector<32x128xbf16>
    %cst_120 = arith.constant dense<0.000000e+00> : vector<4x128xf32>
    %242 = tpu.matmul %238, %241, %cst_120 {dimension_numbers = #tpu.dot_dimension_numbers<[1], [0], [0], [1], [0, 0, 1, 1], [], []>} : vector<4x32xbf16>, vector<32x128xbf16>, vector<4x128xf32> -> vector<4x128xf32>
    %243 = arith.addf %240, %242 : vector<4x128xf32>
    %244 = vector.extract_strided_slice %243 {offsets = [0, 0], sizes = [4, 32], strides = [1, 1]} : vector<4x128xf32> to vector<4x32xf32>
    %245 = arith.negf %244 : vector<4x32xf32>
    %246 = math.exp %245 : vector<4x32xf32>
    %cst_121 = arith.constant 1.000000e+00 : f32
    %247 = vector.broadcast %cst_121 : f32 to vector<4x32xf32>
    %248 = arith.addf %247, %246 : vector<4x32xf32>
    %249 = arith.divf %247, %248 : vector<4x32xf32>
    %250 = vector.extract_strided_slice %243 {offsets = [0, 32], sizes = [4, 32], strides = [1, 1]} : vector<4x128xf32> to vector<4x32xf32>
    %251 = arith.negf %250 : vector<4x32xf32>
    %252 = math.exp %251 : vector<4x32xf32>
    %cst_122 = arith.constant 1.000000e+00 : f32
    %253 = vector.broadcast %cst_122 : f32 to vector<4x32xf32>
    %254 = arith.addf %253, %252 : vector<4x32xf32>
    %255 = arith.divf %253, %254 : vector<4x32xf32>
    %256 = vector.extract_strided_slice %243 {offsets = [0, 64], sizes = [4, 32], strides = [1, 1]} : vector<4x128xf32> to vector<4x32xf32>
    %257 = math.tanh %256 : vector<4x32xf32>
    %258 = vector.extract_strided_slice %243 {offsets = [0, 96], sizes = [4, 32], strides = [1, 1]} : vector<4x128xf32> to vector<4x32xf32>
    %259 = arith.negf %258 : vector<4x32xf32>
    %260 = math.exp %259 : vector<4x32xf32>
    %cst_123 = arith.constant 1.000000e+00 : f32
    %261 = vector.broadcast %cst_123 : f32 to vector<4x32xf32>
    %262 = arith.addf %261, %260 : vector<4x32xf32>
    %263 = arith.divf %261, %262 : vector<4x32xf32>
    %c0_124 = arith.constant 0 : index
    %c0_125 = arith.constant 0 : index
    %264 = vector.load %arg6[%c0_124, %c0_125] : memref<4x32xf32, #tpu.memory_space<vmem>>, vector<4x32xf32>
    %265 = arith.mulf %255, %264 : vector<4x32xf32>
    %266 = arith.mulf %249, %257 : vector<4x32xf32>
    %267 = arith.addf %265, %266 : vector<4x32xf32>
    %268 = math.tanh %267 : vector<4x32xf32>
    %269 = arith.mulf %263, %268 : vector<4x32xf32>
    %c0_126 = arith.constant 0 : index
    %c0_127 = arith.constant 0 : index
    %270 = vector.load %arg6[%c0_126, %c0_127] : memref<4x32xf32, #tpu.memory_space<vmem>>, vector<4x32xf32>
    tpu.vector_store %arg6[%c0_126, %c0_127], %267 {strides = array<i32>} : memref<4x32xf32, #tpu.memory_space<vmem>>, vector<4x32xf32>,
    %c0_128 = arith.constant 0 : index
    %c0_129 = arith.constant 0 : index
    %271 = vector.load %arg5[%c0_128, %c0_129] : memref<4x32xf32, #tpu.memory_space<vmem>>, vector<4x32xf32>
    tpu.vector_store %arg5[%c0_128, %c0_129], %269 {strides = array<i32>} : memref<4x32xf32, #tpu.memory_space<vmem>>, vector<4x32xf32>,
    %272 = arith.truncf %269 : vector<4x32xf32> to vector<4x32xbf16>
    %c0_130 = arith.constant 0 : index
    %c6_131 = arith.constant 6 : index
    %c0_132 = arith.constant 0 : index
    %273 = vector.load %arg4[%c0_130, %c6_131, %c0_132] : memref<4x8x32xbf16, #tpu.memory_space<vmem>>, vector<4x1x32xbf16>
    %274 = vector.shape_cast %273 : vector<4x1x32xbf16> to vector<4x32xbf16>
    %275 = vector.shape_cast %272 : vector<4x32xbf16> to vector<4x1x32xbf16>
    tpu.vector_store %arg4[%c0_130, %c6_131, %c0_132], %275 {strides = array<i32>} : memref<4x8x32xbf16, #tpu.memory_space<vmem>>, vector<4x1x32xbf16>,
    %c0_133 = arith.constant 0 : index
    %c0_134 = arith.constant 0 : index
    %276 = vector.load %arg5[%c0_133, %c0_134] : memref<4x32xf32, #tpu.memory_space<vmem>>, vector<4x32xf32>
    %277 = arith.truncf %276 : vector<4x32xf32> to vector<4x32xbf16>
    %c0_135 = arith.constant 0 : index
    %c7 = arith.constant 7 : index
    %c0_136 = arith.constant 0 : index
    %278 = vector.load %arg2[%c0_135, %c7, %c0_136] : memref<4x8x128xf32, #tpu.memory_space<vmem>>, vector<4x1x128xf32>
    %279 = vector.shape_cast %278 : vector<4x1x128xf32> to vector<4x128xf32>
    %c0_137 = arith.constant 0 : index
    %c0_138 = arith.constant 0 : index
    %280 = vector.load %arg3[%c0_137, %c0_138] : memref<32x128xbf16, #tpu.memory_space<vmem>>, vector<32x128xbf16>
    %cst_139 = arith.constant dense<0.000000e+00> : vector<4x128xf32>
    %281 = tpu.matmul %277, %280, %cst_139 {dimension_numbers = #tpu.dot_dimension_numbers<[1], [0], [0], [1], [0, 0, 1, 1], [], []>} : vector<4x32xbf16>, vector<32x128xbf16>, vector<4x128xf32> -> vector<4x128xf32>
    %282 = arith.addf %279, %281 : vector<4x128xf32>
    %283 = vector.extract_strided_slice %282 {offsets = [0, 0], sizes = [4, 32], strides = [1, 1]} : vector<4x128xf32> to vector<4x32xf32>
    %284 = arith.negf %283 : vector<4x32xf32>
    %285 = math.exp %284 : vector<4x32xf32>
    %cst_140 = arith.constant 1.000000e+00 : f32
    %286 = vector.broadcast %cst_140 : f32 to vector<4x32xf32>
    %287 = arith.addf %286, %285 : vector<4x32xf32>
    %288 = arith.divf %286, %287 : vector<4x32xf32>
    %289 = vector.extract_strided_slice %282 {offsets = [0, 32], sizes = [4, 32], strides = [1, 1]} : vector<4x128xf32> to vector<4x32xf32>
    %290 = arith.negf %289 : vector<4x32xf32>
    %291 = math.exp %290 : vector<4x32xf32>
    %cst_141 = arith.constant 1.000000e+00 : f32
    %292 = vector.broadcast %cst_141 : f32 to vector<4x32xf32>
    %293 = arith.addf %292, %291 : vector<4x32xf32>
    %294 = arith.divf %292, %293 : vector<4x32xf32>
    %295 = vector.extract_strided_slice %282 {offsets = [0, 64], sizes = [4, 32], strides = [1, 1]} : vector<4x128xf32> to vector<4x32xf32>
    %296 = math.tanh %295 : vector<4x32xf32>
    %297 = vector.extract_strided_slice %282 {offsets = [0, 96], sizes = [4, 32], strides = [1, 1]} : vector<4x128xf32> to vector<4x32xf32>
    %298 = arith.negf %297 : vector<4x32xf32>
    %299 = math.exp %298 : vector<4x32xf32>
    %cst_142 = arith.constant 1.000000e+00 : f32
    %300 = vector.broadcast %cst_142 : f32 to vector<4x32xf32>
    %301 = arith.addf %300, %299 : vector<4x32xf32>
    %302 = arith.divf %300, %301 : vector<4x32xf32>
    %c0_143 = arith.constant 0 : index
    %c0_144 = arith.constant 0 : index
    %303 = vector.load %arg6[%c0_143, %c0_144] : memref<4x32xf32, #tpu.memory_space<vmem>>, vector<4x32xf32>
    %304 = arith.mulf %294, %303 : vector<4x32xf32>
    %305 = arith.mulf %288, %296 : vector<4x32xf32>
    %306 = arith.addf %304, %305 : vector<4x32xf32>
    %307 = math.tanh %306 : vector<4x32xf32>
    %308 = arith.mulf %302, %307 : vector<4x32xf32>
    %c0_145 = arith.constant 0 : index
    %c0_146 = arith.constant 0 : index
    %309 = vector.load %arg6[%c0_145, %c0_146] : memref<4x32xf32, #tpu.memory_space<vmem>>, vector<4x32xf32>
    tpu.vector_store %arg6[%c0_145, %c0_146], %306 {strides = array<i32>} : memref<4x32xf32, #tpu.memory_space<vmem>>, vector<4x32xf32>,
    %c0_147 = arith.constant 0 : index
    %c0_148 = arith.constant 0 : index
    %310 = vector.load %arg5[%c0_147, %c0_148] : memref<4x32xf32, #tpu.memory_space<vmem>>, vector<4x32xf32>
    tpu.vector_store %arg5[%c0_147, %c0_148], %308 {strides = array<i32>} : memref<4x32xf32, #tpu.memory_space<vmem>>, vector<4x32xf32>,
    %311 = arith.truncf %308 : vector<4x32xf32> to vector<4x32xbf16>
    %c0_149 = arith.constant 0 : index
    %c7_150 = arith.constant 7 : index
    %c0_151 = arith.constant 0 : index
    %312 = vector.load %arg4[%c0_149, %c7_150, %c0_151] : memref<4x8x32xbf16, #tpu.memory_space<vmem>>, vector<4x1x32xbf16>
    %313 = vector.shape_cast %312 : vector<4x1x32xbf16> to vector<4x32xbf16>
    %314 = vector.shape_cast %311 : vector<4x32xbf16> to vector<4x1x32xbf16>
    tpu.vector_store %arg4[%c0_149, %c7_150, %c0_151], %314 {strides = array<i32>} : memref<4x8x32xbf16, #tpu.memory_space<vmem>>, vector<4x1x32xbf16>,
    return
  }
  func.func @transform_0(%arg0: i32, %arg1: i32) -> (i32, i32, i32) {
    %c0_i32 = arith.constant 0 : i32
    %c0_i32_0 = arith.constant 0 : i32
    return %arg0, %arg1, %c0_i32 : i32, i32, i32
  }
  func.func @transform_1(%arg0: i32, %arg1: i32) -> (i32, i32) {
    %c0_i32 = arith.constant 0 : i32
    %c0_i32_0 = arith.constant 0 : i32
    %c0_i32_1 = arith.constant 0 : i32
    return %c0_i32, %c0_i32_0 : i32, i32
  }
  func.func @transform_2(%arg0: i32, %arg1: i32) -> (i32, i32, i32) {
    %c0_i32 = arith.constant 0 : i32
    %c0_i32_0 = arith.constant 0 : i32
    return %arg0, %arg1, %c0_i32 : i32, i32, i32
  }
}

</mosaic_0001>

<llo_original>
// kernel: image_captioner_forward.3
$region0: #{image_captioner_forward.3}
  #allocation0 [shape = 'u32[]', space=smem, size = 0x4, offset = 0x4, fixed_abs, tag = 'smem constant byte address 0x4 - core index']
  #allocation1 [shape = 'u32[144,128]{1,0:T(1,128)}', space=vmem, size = 0x12000, scoped, tag = 'internal scratch']
  %s0 = inlined_call_operand.vmem [shape: bf16[32,32], index: 0, kind: input, shape index: {}]
  %s1 = inlined_call_operand.vmem [shape: bf16[32,128], index: 1, kind: input, shape index: {}]
  %s2 = inlined_call_operand.vmem [shape: f32[1,128], index: 2, kind: input, shape index: {}]
  %s3 = inlined_call_operand.vmem [shape: f32[32,128], index: 3, kind: output, shape index: {}]
  %s4 = sld [smem:[#allocation0]]
  $region22: #{image_captioner_forward.3} parent=0
    _
  %s6 = ssub.s32 1, %s4
  %s7 = scalar_select 0, %s6, %s4
  // Predicated region
  $region2: #{image_captioner_forward.3} parent=0 // pred_check
    _
  $region3: #{image_captioner_forward.3} parent=0 // pred_check_branch
    %9 = sbr.rel (0) target = $region5
  $region4: #{image_captioner_forward.3} parent=0 // pred_region
    _
  $region5: #{image_captioner_forward.3} parent=0 // pred_fallthru
    _
  // Predicated region
  $region6: #{image_captioner_forward.3} parent=0 // pred_check
    _
  $region7: #{image_captioner_forward.3} parent=0 // pred_check_branch
    %11 = sbr.rel (0) target = $region9
  $region8: #{image_captioner_forward.3} parent=0 // pred_region
    _
  $region9: #{image_captioner_forward.3} parent=0 // pred_fallthru
    _
  // Predicated region
  $region10: #{image_captioner_forward.3} parent=0 // pred_check
    _
  $region11: #{image_captioner_forward.3} parent=0 // pred_check_branch
    %13 = sbr.rel (0) target = $region13
  $region12: #{image_captioner_forward.3} parent=0 // pred_region
    _
  $region13: #{image_captioner_forward.3} parent=0 // pred_fallthru
    _
  %v15 = vld [vmem:[%s0] sm:$0xf]
  %v16 = vld [vmem:[%s0 + $0x4] sm:$0xf]
  %v17 = vld [vmem:[%s0 + $0x8] sm:$0xf]
  %v18 = vld [vmem:[%s0 + $0xc] sm:$0xf]
  %v19 = vld [vmem:[%s1] sm:$0xf]
  %v20 = vld [vmem:[%s1 + $0x4] sm:$0xf]
  %v21 = vld [vmem:[%s1 + $0x8] sm:$0xf]
  %v22 = vld [vmem:[%s1 + $0xc] sm:$0xf]
  %v23 = vld [vmem:[%s2] sm:$0x1]
  %v25 = vlaneseq
  %v26 = vshrl.u32 %v25, 7
  %v27 = vsub.s32 0, %v26
  %v28 = vrot.slane %v23, %v27
  %v34 = vunpack.c.l.b16 %v15
  %v35 = vunpack.c.l.b16 %v16
  %v36 = vunpack.c.l.b16 %v17
  %v37 = vunpack.c.l.b16 %v18
  %v38 = vpack.c.b16 %v35, %v34
  %v39 = vpack.c.b16 %v37, %v36
  %v44 = vunpack.c.l.b16 %v19
  %v45 = vunpack.c.l.b16 %v20
  %v46 = vunpack.c.l.b16 %v21
  %v47 = vunpack.c.l.b16 %v22
  %v48 = vpack.c.b16 %v45, %v44
  %v49 = vpack.c.b16 %v47, %v46
  %vm52 = vcmask 261120
  %v54 = vsel %vm52, %v38, 0
  %v57 = vsel %vm52, %v39, 0
  %59 = vmatprep.subr.bf16.mxu0 0
  %60 = vmatpush1.bf16.msra.mxu0 0
  %61 = vmatprep.subr.bf16.mxu0 0
  %62 = vmatpush1.bf16.msra.mxu0 0
  %63 = vmatprep.subr.bf16.mxu0 0
  %64 = vmatpush1.bf16.msra.mxu0 0
  %65 = vmatprep.subr.bf16.mxu0 0
  %66 = vmatpush1.bf16.msra.mxu0 0
  %67 = vmatprep.subr.bf16.mxu0 0
  %68 = vmatpush1.bf16.msra.mxu0 0
  %69 = vmatprep.subr.bf16.mxu0 0
  %70 = vmatpush1.bf16.msra.mxu0 0
  %71 = vmatprep.subr.bf16.mxu0 0
  %72 = vmatpush1.bf16.msra.mxu0 %v49
  %73 = vmatprep.subr.bf16.mxu0 0
  %74 = vmatpush1.bf16.msra.mxu0 %v48
  %75 = vmatprep.subr.bf16.mxu0 0
  %76 = vmatpush2.bf16.msra.mxu0 0
  %77 = vmatprep.subr.bf16.mxu0 0
  %78 = vmatpush2.bf16.msra.mxu0 0
  %79 = vmatprep.subr.bf16.mxu0 0
  %80 = vmatpush2.bf16.msra.mxu0 0
  %81 = vmatprep.subr.bf16.mxu0 0
  %82 = vmatpush2.bf16.msra.mxu0 0
  %83 = vmatprep.subr.bf16.mxu0 0
  %84 = vmatpush2.bf16.msra.mxu0 0
  %85 = vmatprep.subr.bf16.mxu0 0
  %86 = vmatpush2.bf16.msra.mxu0 0
  %87 = vmatprep.subr.bf16.mxu0 0
  %88 = vmatpush2.bf16.msra.mxu0 0
  %89 = vmatprep.subr.bf16.mxu0 0
  %90 = vmatpush2.bf16.msra.mxu0 0
  %91 = vmatprep.mubr.bf16.mxu0 0
  %92 = vmatmul.mubr.bf16.gmra.mxu0 %v54
  %v93 = vpop.f32.mrf.mxu0
  %v94 = vadd.f32 %v28, %v93
  %v95 = vpop.f32.mrf.mxu0
  %v96 = vpop.f32.mrf.mxu0
  %v97 = vadd.f32 %v28, %v96
  %v98 = vpop.f32.mrf.mxu0
  %99 = vmatprep.mubr.bf16.mxu0 0
  %100 = vmatmul.mubr.bf16.gmra.mxu0 %v57
  %v101 = vpop.f32.mrf.mxu0
  %v102 = vadd.f32 %v28, %v101
  %v103 = vpop.f32.mrf.mxu0
  %v104 = vpop.f32.mrf.mxu0
  %v105 = vadd.f32 %v28, %v104
  %v106 = vpop.f32.mrf.mxu0
  %107 = vdwg.mxu0
  %108 = vst [vmem:[%s3] sm:$0xff] %v94
  %109 = vst [vmem:[%s3 + $0x8] sm:$0xff] %v97
  %110 = vst [vmem:[%s3 + $0x10] sm:$0xff] %v102
  %111 = vst [vmem:[%s3 + $0x18] sm:$0xff] %v105
  // Predicated region
  $region14: #{image_captioner_forward.3} parent=0 // pred_check
    _
  $region15: #{image_captioner_forward.3} parent=0 // pred_check_branch
    %113 = sbr.rel (0) target = $region17
  $region16: #{image_captioner_forward.3} parent=0 // pred_region
    _
  $region17: #{image_captioner_forward.3} parent=0 // pred_fallthru
    _
  // Predicated region
  $region18: #{image_captioner_forward.3} parent=0 // pred_check
    _
  $region19: #{image_captioner_forward.3} parent=0 // pred_check_branch
    %115 = sbr.rel (0) target = $region21
  $region20: #{image_captioner_forward.3} parent=0 // pred_region
    _
  $region21: #{image_captioner_forward.3} parent=0 // pred_fallthru
    _

// kernel: image_captioner_forward.5
$region0: #{image_captioner_forward.5}
  #allocation0 [shape = 'u32[]', space=smem, size = 0x4, offset = 0x4, fixed_abs, tag = 'smem constant byte address 0x4 - core index']
  #allocation1 [shape = 'u32[144,128]{1,0:T(1,128)}', space=vmem, size = 0x12000, scoped, tag = 'internal scratch']
  %s0 = inlined_call_operand.vmem [shape: bf16[32,32], index: 0, kind: input, shape index: {}]
  %s1 = inlined_call_operand.vmem [shape: bf16[32,128], index: 1, kind: input, shape index: {}]
  %s2 = inlined_call_operand.vmem [shape: f32[1,128], index: 2, kind: input, shape index: {}]
  %s3 = inlined_call_operand.hbm [shape: bf16[32,128], index: 3, kind: output, shape index: {}]
  %s4 = sld [smem:[#allocation0]]
  $region22: #{image_captioner_forward.5} parent=0
    _
  %s6 = ssub.s32 1, %s4
  %s7 = scalar_select 0, %s6, %s4
  $region1: #{image_captioner_forward.5} parent=0
    #allocation2 [shape = 'u8[8192]{0}', space=vmem, size = 0x2000, scoped, tag = 'output window, operand 0, single buffered']
    #allocation3 [shape = 's32[1]{0}', space=sflag, size = 0x4, scoped, tag = 'scoped memory for image_captioner_forward.5']
    %8 = vsyncpa [#allocation3], 0
    // Predicated region
    $region2: #{image_captioner_forward.5} parent=1 // pred_check
      _
    $region3: #{image_captioner_forward.5} parent=1 // pred_check_branch
      %10 = sbr.rel (0) target = $region5
    $region4: #{image_captioner_forward.5} parent=1 // pred_region
      _
    $region5: #{image_captioner_forward.5} parent=1 // pred_fallthru
      _
    // Predicated region
    $region6: #{image_captioner_forward.5} parent=1 // pred_check
      _
    $region7: #{image_captioner_forward.5} parent=1 // pred_check_branch
      %12 = sbr.rel (0) target = $region9
    $region8: #{image_captioner_forward.5} parent=1 // pred_region
      _
    $region9: #{image_captioner_forward.5} parent=1 // pred_fallthru
      _
    // Predicated region
    $region10: #{image_captioner_forward.5} parent=1 // pred_check
      _
    $region11: #{image_captioner_forward.5} parent=1 // pred_check_branch
      %14 = sbr.rel (0) target = $region13
    $region12: #{image_captioner_forward.5} parent=1 // pred_region
      _
    $region13: #{image_captioner_forward.5} parent=1 // pred_fallthru
      _
    %v16 = vld [vmem:[%s0] sm:$0xf]
    %v17 = vld [vmem:[%s0 + $0x4] sm:$0xf]
    %v18 = vld [vmem:[%s0 + $0x8] sm:$0xf]
    %v19 = vld [vmem:[%s0 + $0xc] sm:$0xf]
    %v20 = vld [vmem:[%s1] sm:$0xf]
    %v21 = vld [vmem:[%s1 + $0x4] sm:$0xf]
    %v22 = vld [vmem:[%s1 + $0x8] sm:$0xf]
    %v23 = vld [vmem:[%s1 + $0xc] sm:$0xf]
    %v24 = vld [vmem:[%s2] sm:$0x1]
    %v26 = vlaneseq
    %v27 = vshrl.u32 %v26, 7
    %v28 = vsub.s32 0, %v27
    %v29 = vrot.slane %v24, %v28
    %v35 = vunpack.c.l.b16 %v16
    %v36 = vunpack.c.l.b16 %v17
    %v37 = vunpack.c.l.b16 %v18
    %v38 = vunpack.c.l.b16 %v19
    %v39 = vpack.c.b16 %v36, %v35
    %v40 = vpack.c.b16 %v38, %v37
    %v45 = vunpack.c.l.b16 %v20
    %v46 = vunpack.c.l.b16 %v21
    %v47 = vunpack.c.l.b16 %v22
    %v48 = vunpack.c.l.b16 %v23
    %v49 = vpack.c.b16 %v46, %v45
    %v50 = vpack.c.b16 %v48, %v47
    %vm53 = vcmask 261120
    %v55 = vsel %vm53, %v39, 0
    %v58 = vsel %vm53, %v40, 0
    %60 = vmatprep.subr.bf16.mxu0 0
    %61 = vmatpush1.bf16.msra.mxu0 0
    %62 = vmatprep.subr.bf16.mxu0 0
    %63 = vmatpush1.bf16.msra.mxu0 0
    %64 = vmatprep.subr.bf16.mxu0 0
    %65 = vmatpush1.bf16.msra.mxu0 0
    %66 = vmatprep.subr.bf16.mxu0 0
    %67 = vmatpush1.bf16.msra.mxu0 0
    %68 = vmatprep.subr.bf16.mxu0 0
    %69 = vmatpush1.bf16.msra.mxu0 0
    %70 = vmatprep.subr.bf16.mxu0 0
    %71 = vmatpush1.bf16.msra.mxu0 0
    %72 = vmatprep.subr.bf16.mxu0 0
    %73 = vmatpush1.bf16.msra.mxu0 %v50
    %74 = vmatprep.subr.bf16.mxu0 0
    %75 = vmatpush1.bf16.msra.mxu0 %v49
    %76 = vmatprep.subr.bf16.mxu0 0
    %77 = vmatpush2.bf16.msra.mxu0 0
    %78 = vmatprep.subr.bf16.mxu0 0
    %79 = vmatpush2.bf16.msra.mxu0 0
    %80 = vmatprep.subr.bf16.mxu0 0
    %81 = vmatpush2.bf16.msra.mxu0 0
    %82 = vmatprep.subr.bf16.mxu0 0
    %83 = vmatpush2.bf16.msra.mxu0 0
    %84 = vmatprep.subr.bf16.mxu0 0
    %85 = vmatpush2.bf16.msra.mxu0 0
    %86 = vmatprep.subr.bf16.mxu0 0
    %87 = vmatpush2.bf16.msra.mxu0 0
    %88 = vmatprep.subr.bf16.mxu0 0
    %89 = vmatpush2.bf16.msra.mxu0 0
    %90 = vmatprep.subr.bf16.mxu0 0
    %91 = vmatpush2.bf16.msra.mxu0 0
    %92 = vmatprep.mubr.bf16.mxu0 0
    %93 = vmatmul.mubr.bf16.gmra.mxu0 %v55
    %v94 = vpop.f32.mrf.mxu0
    %v95 = vadd.f32 %v29, %v94
    %v96 = vpop.f32.mrf.mxu0
    %v97 = vpop.f32.mrf.mxu0
    %v98 = vadd.f32 %v29, %v97
    %v99 = vpop.f32.mrf.mxu0
    %100 = vmatprep.mubr.bf16.mxu0 0
    %101 = vmatmul.mubr.bf16.gmra.mxu0 %v58
    %v102 = vpop.f32.mrf.mxu0
    %v103 = vadd.f32 %v29, %v102
    %v104 = vpop.f32.mrf.mxu0
    %v105 = vpop.f32.mrf.mxu0
    %v106 = vadd.f32 %v29, %v105
    %v107 = vpop.f32.mrf.mxu0
    %108 = vdwg.mxu0
    %v109 = vpack.c.bf16 %v98, %v95
    %v110 = vpack.c.bf16 %v106, %v103
    %v113 = vunpack.c.l.b16 %v109
    %v114 = vunpack.c.h.b16 %v109
    %v115 = vunpack.c.l.b16 %v110
    %v116 = vunpack.c.h.b16 %v110
    %v117 = vpack.c.b16 %v113, %v113
    %v118 = vpack.c.b16 %v114, %v114
    %v119 = vpack.c.b16 %v115, %v115
    %v120 = vpack.c.b16 %v116, %v116
    %125 = vst [vmem:[#allocation2] sm:$0xf] %v117
    %126 = vst [vmem:[#allocation2 + $0x4] sm:$0xf] %v118
    %127 = vst [vmem:[#allocation2 + $0x8] sm:$0xf] %v119
    %128 = vst [vmem:[#allocation2 + $0xc] sm:$0xf] %v120
    // Predicated region
    $region14: #{image_captioner_forward.5} parent=1 // pred_check
      _
    $region15: #{image_captioner_forward.5} parent=1 // pred_check_branch
      %130 = sbr.rel (0) target = $region17
    $region16: #{image_captioner_forward.5} parent=1 // pred_region
      %s132 = ssub.s32 256, 256
      %133 = vsyncadd [#allocation3], %s132
      %s134 = sshll.u32 [#allocation2], 4
      %s135 = int_to_ptr.vmem [resolvable:$true] %s134
      %140 = dma.vmem_to_hbm [thread:$0]  %s135, 256, %s3, [#allocation3], 64, 64, 4
    $region17: #{image_captioner_forward.5} parent=1 // pred_fallthru
      _
    // Predicated region
    $region18: #{image_captioner_forward.5} parent=1 // pred_check
      _
    $region19: #{image_captioner_forward.5} parent=1 // pred_check_branch
      %142 = sbr.rel (0) target = $region21
    $region20: #{image_captioner_forward.5} parent=1 // pred_region
      %143 = dma.done [#allocation3], 256
    $region21: #{image_captioner_forward.5} parent=1 // pred_fallthru
      _
    %144 = vsyncpa [#allocation3], 1

// kernel: image_captioner_forward.4
$region0: #{image_captioner_forward.4}
  #allocation0 [shape = 'u32[]', space=smem, size = 0x4, offset = 0x4, fixed_abs, tag = 'smem constant byte address 0x4 - core index']
  #allocation1 [shape = 'u32[144,128]{1,0:T(1,128)}', space=vmem, size = 0x12000, scoped, tag = 'internal scratch']
  #allocation2 [shape = 'f32[4,32]{1,0:T(4,128)}', space=vmem, size = 0x800, scoped, tag = 'scratch operand']
  #allocation3 [shape = 'f32[4,32]{1,0:T(4,128)}', space=vmem, size = 0x800, scoped, tag = 'scratch operand']
  %s0 = inlined_call_operand.vmem [shape: f32[4,8,128], index: 0, kind: input, shape index: {}]
  %s1 = inlined_call_operand.vmem [shape: bf16[32,128], index: 1, kind: input, shape index: {}]
  %s2 = inlined_call_operand.vmem [shape: bf16[4,8,32], index: 2, kind: output, shape index: {}]
  %s3 = sld [smem:[#allocation0]]
  $region22: #{image_captioner_forward.4} parent=0
    _
  %s5 = ssub.s32 1, %s3
  %s6 = scalar_select 0, %s5, %s3
  // Predicated region
  $region2: #{image_captioner_forward.4} parent=0 // pred_check
    _
  $region3: #{image_captioner_forward.4} parent=0 // pred_check_branch
    %8 = sbr.rel (0) target = $region5
  $region4: #{image_captioner_forward.4} parent=0 // pred_region
    _
  $region5: #{image_captioner_forward.4} parent=0 // pred_fallthru
    _
  // Predicated region
  $region6: #{image_captioner_forward.4} parent=0 // pred_check
    _
  $region7: #{image_captioner_forward.4} parent=0 // pred_check_branch
    %10 = sbr.rel (0) target = $region9
  $region8: #{image_captioner_forward.4} parent=0 // pred_region
    _
  $region9: #{image_captioner_forward.4} parent=0 // pred_fallthru
    _
  %p12 = scmp.eq.s32.totalorder 0, 0
  // Predicated region
  $region10: #{image_captioner_forward.4} parent=0 // pred_check
    %p13 = pneg %p12
  $region11: #{image_captioner_forward.4} parent=0 // pred_check_branch
    %15 = sbr.rel (%p13) target = $region13
  $region12: #{image_captioner_forward.4} parent=0 // pred_region
    %vm16 = vcmask 257024
    %17 = vst.msk [vmem:[#allocation2] sm:$0xf] %vm16, 0.0
    %18 = vst.msk [vmem:[#allocation3] sm:$0xf] %vm16, 0.0
  $region13: #{image_captioner_forward.4} parent=0 // pred_fallthru
    _
  %v19 = vld [vmem:[#allocation2] sm:$0xf]
  %v20 = vpack.c.bf16 %v19, %v19
  %v21 = vld [vmem:[%s0] sm:$0x1]
  %v22 = vld [vmem:[%s0 + $0x8] sm:$0x1]
  %v23 = vld [vmem:[%s0 + $0x10] sm:$0x1]
  %v24 = vld [vmem:[%s0 + $0x18] sm:$0x1]
  %v25 = vld [vmem:[%s1] sm:$0xf]
  %v26 = vld [vmem:[%s1 + $0x4] sm:$0xf]
  %v27 = vld [vmem:[%s1 + $0x8] sm:$0xf]
  %v28 = vld [vmem:[%s1 + $0xc] sm:$0xf]
  %v33 = vunpack.c.l.b16 %v25
  %v34 = vunpack.c.l.b16 %v26
  %v35 = vunpack.c.l.b16 %v27
  %v36 = vunpack.c.l.b16 %v28
  %v37 = vpack.c.b16 %v34, %v33
  %v38 = vpack.c.b16 %v36, %v35
  %vm41 = vcmask 261120
  %v43 = vsel %vm41, %v20, 0
  %45 = vmatprep.subr.bf16.mxu0 0
  %46 = vmatpush1.bf16.msra.mxu0 0
  %47 = vmatprep.subr.bf16.mxu0 0
  %48 = vmatpush1.bf16.msra.mxu0 0
  %49 = vmatprep.subr.bf16.mxu0 0
  %50 = vmatpush1.bf16.msra.mxu0 0
  %51 = vmatprep.subr.bf16.mxu0 0
  %52 = vmatpush1.bf16.msra.mxu0 0
  %53 = vmatprep.subr.bf16.mxu0 0
  %54 = vmatpush1.bf16.msra.mxu0 0
  %55 = vmatprep.subr.bf16.mxu0 0
  %56 = vmatpush1.bf16.msra.mxu0 0
  %57 = vmatprep.subr.bf16.mxu0 0
  %58 = vmatpush1.bf16.msra.mxu0 %v38
  %59 = vmatprep.subr.bf16.mxu0 0
  %60 = vmatpush1.bf16.msra.mxu0 %v37
  %61 = vmatprep.subr.bf16.mxu0 0
  %62 = vmatpush2.bf16.msra.mxu0 0
  %63 = vmatprep.subr.bf16.mxu0 0
  %64 = vmatpush2.bf16.msra.mxu0 0
  %65 = vmatprep.subr.bf16.mxu0 0
  %66 = vmatpush2.bf16.msra.mxu0 0
  %67 = vmatprep.subr.bf16.mxu0 0
  %68 = vmatpush2.bf16.msra.mxu0 0
  %69 = vmatprep.subr.bf16.mxu0 0
  %70 = vmatpush2.bf16.msra.mxu0 0
  %71 = vmatprep.subr.bf16.mxu0 0
  %72 = vmatpush2.bf16.msra.mxu0 0
  %73 = vmatprep.subr.bf16.mxu0 0
  %74 = vmatpush2.bf16.msra.mxu0 0
  %75 = vmatprep.subr.bf16.mxu0 0
  %76 = vmatpush2.bf16.msra.mxu0 0
  %77 = vmatprep.mubr.bf16.mxu0 0
  %78 = vmatmul.mubr.bf16.gmra.mxu0 %v43
  %v79 = vpop.f32.mrf.mxu0
  %v80 = vadd.f32 0.0, %v79
  %v81 = vpop.f32.mrf.mxu0
  %v82 = vpop.f32.mrf.mxu0
  %v83 = vpop.f32.mrf.mxu0
  %84 = vdwg.mxu0
  %v86 = vrot.slane %v80, 1
  %v87 = vrot.slane %v80, 2
  %v88 = vrot.slane %v80, 3
  %v93 = vadd.f32 %v21, %v80
  %v94 = vadd.f32 %v22, %v86
  %v95 = vadd.f32 %v23, %v87
  %v96 = vadd.f32 %v24, %v88
  %v97 = vxor.u32 %v93, 2147483648
  %v98 = vxor.u32 %v94, 2147483648
  %v99 = vxor.u32 %v95, 2147483648
  %v100 = vxor.u32 %v96, 2147483648
  %v101 = vmul.f32 %v97, 1.442695
  %v102 = vpow.pop %v101
  %v103 = vmul.f32 %v98, 1.442695
  %v104 = vpow.pop %v103
  %v105 = vmul.f32 %v99, 1.442695
  %v106 = vpow.pop %v105
  %v107 = vmul.f32 %v100, 1.442695
  %v108 = vpow.pop %v107
  %v109 = vadd.f32 %v102, 1.0
  %v110 = vadd.f32 %v104, 1.0
  %v111 = vadd.f32 %v106, 1.0
  %v112 = vadd.f32 %v108, 1.0
  %v113 = vrcp.pop %v109
  %v114 = vmul.f32 1.0, %v113
  %v115 = vrcp.pop %v110
  %v116 = vmul.f32 1.0, %v115
  %v117 = vrcp.pop %v111
  %v118 = vmul.f32 1.0, %v117
  %v119 = vrcp.pop %v112
  %v120 = vmul.f32 1.0, %v119
  %v121 = vtanh.pop %v93
  %v122 = vtanh.pop %v94
  %v123 = vtanh.pop %v95
  %v124 = vtanh.pop %v96
  %v125 = vld [vmem:[#allocation3] sm:$0xf]
  %v127 = vrot.slane %v125, 1
  %v128 = vrot.slane %v125, 2
  %v129 = vrot.slane %v125, 3
  %130 = vrot.lane.b32.xlu0 %v125, 32
  %v131 = vpop.permute.xlu0 %130
  %132 = vrot.lane.b32.xlu0 %v127, 32
  %v133 = vpop.permute.xlu0 %132
  %134 = vrot.lane.b32.xlu0 %v128, 32
  %v135 = vpop.permute.xlu0 %134
  %136 = vrot.lane.b32.xlu0 %v129, 32
  %v137 = vpop.permute.xlu0 %136
  %v142 = vmul.f32 %v114, %v131
  %v143 = vmul.f32 %v116, %v133
  %v144 = vmul.f32 %v118, %v135
  %v145 = vmul.f32 %v120, %v137
  %150 = vrot.lane.b32.xlu0 %v121, 64
  %v151 = vpop.permute.xlu0 %150
  %152 = vrot.lane.b32.xlu0 %v122, 64
  %v153 = vpop.permute.xlu0 %152
  %154 = vrot.lane.b32.xlu0 %v123, 64
  %v155 = vpop.permute.xlu0 %154
  %156 = vrot.lane.b32.xlu0 %v124, 64
  %v157 = vpop.permute.xlu0 %156
  %v162 = vmul.f32 %v114, %v151
  %v163 = vmul.f32 %v116, %v153
  %v164 = vmul.f32 %v118, %v155
  %v165 = vmul.f32 %v120, %v157
  %170 = vrot.lane.b32.xlu0 %v162, 32
  %v171 = vpop.permute.xlu0 %170
  %172 = vrot.lane.b32.xlu0 %v163, 32
  %v173 = vpop.permute.xlu0 %172
  %174 = vrot.lane.b32.xlu0 %v164, 32
  %v175 = vpop.permute.xlu0 %174
  %176 = vrot.lane.b32.xlu0 %v165, 32
  %v177 = vpop.permute.xlu0 %176
  %v182 = vadd.f32 %v142, %v171
  %v183 = vadd.f32 %v143, %v173
  %v184 = vadd.f32 %v144, %v175
  %v185 = vadd.f32 %v145, %v177
  %v186 = vtanh.pop %v182
  %v187 = vtanh.pop %v183
  %v188 = vtanh.pop %v184
  %v189 = vtanh.pop %v185
  %194 = vrot.lane.b32.xlu0 %v186, 64
  %v195 = vpop.permute.xlu0 %194
  %196 = vrot.lane.b32.xlu0 %v187, 64
  %v197 = vpop.permute.xlu0 %196
  %198 = vrot.lane.b32.xlu0 %v188, 64
  %v199 = vpop.permute.xlu0 %198
  %200 = vrot.lane.b32.xlu0 %v189, 64
  %v201 = vpop.permute.xlu0 %200
  %v206 = vmul.f32 %v114, %v195
  %v207 = vmul.f32 %v116, %v197
  %v208 = vmul.f32 %v118, %v199
  %v209 = vmul.f32 %v120, %v201
  %v214 = vrot.slane %v183, 7
  %vm215 = vcmask 1041409
  %v216 = vsel %vm215, %v214, %v182
  %v217 = vrot.slane %v184, 6
  %vm218 = vcmask 1042434
  %v219 = vsel %vm218, %v217, %v216
  %v220 = vrot.slane %v185, 5
  %vm221 = vcmask 1043459
  %v222 = vsel %vm221, %v220, %v219
  %223 = vrot.lane.b32.xlu0 %v222, 96
  %v224 = vpop.permute.xlu0 %223
  %vm226 = vcmask 257024
  %227 = vst.msk [vmem:[#allocation3] sm:$0xf] %vm226, %v224
  %v232 = vrot.slane %v207, 7
  %v233 = vsel %vm215, %v232, %v206
  %v234 = vrot.slane %v208, 6
  %v235 = vsel %vm218, %v234, %v233
  %v236 = vrot.slane %v209, 5
  %v237 = vsel %vm221, %v236, %v235
  %238 = vrot.lane.b32.xlu0 %v237, 32
  %v239 = vpop.permute.xlu0 %238
  %241 = vst.msk [vmem:[#allocation2] sm:$0xf] %vm226, %v239
  %v242 = vpack.c.bf16 %v206, %v206
  %v243 = vpack.c.bf16 %v207, %v207
  %v244 = vpack.c.bf16 %v208, %v208
  %v245 = vpack.c.bf16 %v209, %v209
  %v250 = vunpack.c.l.b16 %v242
  %v251 = vunpack.c.l.b16 %v243
  %v252 = vunpack.c.l.b16 %v244
  %v253 = vunpack.c.l.b16 %v245
  %v254 = vpack.c.b16 %v250, %v250
  %v255 = vpack.c.b16 %v251, %v251
  %v256 = vpack.c.b16 %v252, %v252
  %v257 = vpack.c.b16 %v253, %v253
  %258 = vrot.lane.b32.xlu0 %v254, 32
  %v259 = vpop.permute.xlu0 %258
  %260 = vrot.lane.b32.xlu0 %v255, 32
  %v261 = vpop.permute.xlu0 %260
  %262 = vrot.lane.b32.xlu0 %v256, 32
  %v263 = vpop.permute.xlu0 %262
  %264 = vrot.lane.b32.xlu0 %v257, 32
  %v265 = vpop.permute.xlu0 %264
  %vm270 = vcmask 253952
  %vm271 = vsmask.f32 256
  %vm272 = vmand %vm270, %vm271
  %v273 = vld [vmem:[%s2] sm:$0x1]
  %v274 = vsel %vm272, %v259, %v273
  %275 = vst [vmem:[%s2] sm:$0x1] %v274
  %v276 = vld [vmem:[%s2 + $0x4] sm:$0x1]
  %v277 = vsel %vm272, %v261, %v276
  %278 = vst [vmem:[%s2 + $0x4] sm:$0x1] %v277
  %v279 = vld [vmem:[%s2 + $0x8] sm:$0x1]
  %v280 = vsel %vm272, %v263, %v279
  %281 = vst [vmem:[%s2 + $0x8] sm:$0x1] %v280
  %v282 = vld [vmem:[%s2 + $0xc] sm:$0x1]
  %v283 = vsel %vm272, %v265, %v282
  %284 = vst [vmem:[%s2 + $0xc] sm:$0x1] %v283
  %v285 = vld [vmem:[#allocation2] sm:$0xf]
  %v286 = vpack.c.bf16 %v285, %v285
  %v287 = vld [vmem:[%s0 + $0x1] sm:$0x1]
  %v288 = vld [vmem:[%s0 + $0x9] sm:$0x1]
  %v289 = vld [vmem:[%s0 + $0x11] sm:$0x1]
  %v290 = vld [vmem:[%s0 + $0x19] sm:$0x1]
  %v291 = vld [vmem:[%s1] sm:$0xf]
  %v292 = vld [vmem:[%s1 + $0x4] sm:$0xf]
  %v293 = vld [vmem:[%s1 + $0x8] sm:$0xf]
  %v294 = vld [vmem:[%s1 + $0xc] sm:$0xf]
  %v299 = vunpack.c.l.b16 %v291
  %v300 = vunpack.c.l.b16 %v292
  %v301 = vunpack.c.l.b16 %v293
  %v302 = vunpack.c.l.b16 %v294
  %v303 = vpack.c.b16 %v300, %v299
  %v304 = vpack.c.b16 %v302, %v301
  %v308 = vsel %vm41, %v286, 0
  %310 = vmatprep.subr.bf16.mxu0 0
  %311 = vmatpush1.bf16.msra.mxu0 0
  %312 = vmatprep.subr.bf16.mxu0 0
  %313 = vmatpush1.bf16.msra.mxu0 0
  %314 = vmatprep.subr.bf16.mxu0 0
  %315 = vmatpush1.bf16.msra.mxu0 0
  %316 = vmatprep.subr.bf16.mxu0 0
  %317 = vmatpush1.bf16.msra.mxu0 0
  %318 = vmatprep.subr.bf16.mxu0 0
  %319 = vmatpush1.bf16.msra.mxu0 0
  %320 = vmatprep.subr.bf16.mxu0 0
  %321 = vmatpush1.bf16.msra.mxu0 0
  %322 = vmatprep.subr.bf16.mxu0 0
  %323 = vmatpush1.bf16.msra.mxu0 %v304
  %324 = vmatprep.subr.bf16.mxu0 0
  %325 = vmatpush1.bf16.msra.mxu0 %v303
  %326 = vmatprep.subr.bf16.mxu0 0
  %327 = vmatpush2.bf16.msra.mxu0 0
  %328 = vmatprep.subr.bf16.mxu0 0
  %329 = vmatpush2.bf16.msra.mxu0 0
  %330 = vmatprep.subr.bf16.mxu0 0
  %331 = vmatpush2.bf16.msra.mxu0 0
  %332 = vmatprep.subr.bf16.mxu0 0
  %333 = vmatpush2.bf16.msra.mxu0 0
  %334 = vmatprep.subr.bf16.mxu0 0
  %335 = vmatpush2.bf16.msra.mxu0 0
  %336 = vmatprep.subr.bf16.mxu0 0
  %337 = vmatpush2.bf16.msra.mxu0 0
  %338 = vmatprep.subr.bf16.mxu0 0
  %339 = vmatpush2.bf16.msra.mxu0 0
  %340 = vmatprep.subr.bf16.mxu0 0
  %341 = vmatpush2.bf16.msra.mxu0 0
  %342 = vmatprep.mubr.bf16.mxu0 0
  %343 = vmatmul.mubr.bf16.gmra.mxu0 %v308
  %v344 = vpop.f32.mrf.mxu0
  %v345 = vadd.f32 0.0, %v344
  %v346 = vpop.f32.mrf.mxu0
  %v347 = vpop.f32.mrf.mxu0
  %v348 = vpop.f32.mrf.mxu0
  %349 = vdwg.mxu0
  %v351 = vrot.slane %v345, 1
  %v352 = vrot.slane %v345, 2
  %v353 = vrot.slane %v345, 3
  %v358 = vadd.f32 %v287, %v345
  %v359 = vadd.f32 %v288, %v351
  %v360 = vadd.f32 %v289, %v352
  %v361 = vadd.f32 %v290, %v353
  %v362 = vxor.u32 %v358, 2147483648
  %v363 = vxor.u32 %v359, 2147483648
  %v364 = vxor.u32 %v360, 2147483648
  %v365 = vxor.u32 %v361, 2147483648
  %v366 = vmul.f32 %v362, 1.442695
  %v367 = vpow.pop %v366
  %v368 = vmul.f32 %v363, 1.442695
  %v369 = vpow.pop %v368
  %v370 = vmul.f32 %v364, 1.442695
  %v371 = vpow.pop %v370
  %v372 = vmul.f32 %v365, 1.442695
  %v373 = vpow.pop %v372
  %v374 = vadd.f32 %v367, 1.0
  %v375 = vadd.f32 %v369, 1.0
  %v376 = vadd.f32 %v371, 1.0
  %v377 = vadd.f32 %v373, 1.0
  %v378 = vrcp.pop %v374
  %v379 = vmul.f32 1.0, %v378
  %v380 = vrcp.pop %v375
  %v381 = vmul.f32 1.0, %v380
  %v382 = vrcp.pop %v376
  %v383 = vmul.f32 1.0, %v382
  %v384 = vrcp.pop %v377
  %v385 = vmul.f32 1.0, %v384
  %v386 = vtanh.pop %v358
  %v387 = vtanh.pop %v359
  %v388 = vtanh.pop %v360
  %v389 = vtanh.pop %v361
  %v390 = vld [vmem:[#allocation3] sm:$0xf]
  %v392 = vrot.slane %v390, 1
  %v393 = vrot.slane %v390, 2
  %v394 = vrot.slane %v390, 3
  %395 = vrot.lane.b32.xlu0 %v390, 32
  %v396 = vpop.permute.xlu0 %395
  %397 = vrot.lane.b32.xlu0 %v392, 32
  %v398 = vpop.permute.xlu0 %397
  %399 = vrot.lane.b32.xlu0 %v393, 32
  %v400 = vpop.permute.xlu0 %399
  %401 = vrot.lane.b32.xlu0 %v394, 32
  %v402 = vpop.permute.xlu0 %401
  %v407 = vmul.f32 %v379, %v396
  %v408 = vmul.f32 %v381, %v398
  %v409 = vmul.f32 %v383, %v400
  %v410 = vmul.f32 %v385, %v402
  %415 = vrot.lane.b32.xlu0 %v386, 64
  %v416 = vpop.permute.xlu0 %415
  %417 = vrot.lane.b32.xlu0 %v387, 64
  %v418 = vpop.permute.xlu0 %417
  %419 = vrot.lane.b32.xlu0 %v388, 64
  %v420 = vpop.permute.xlu0 %419
  %421 = vrot.lane.b32.xlu0 %v389, 64
  %v422 = vpop.permute.xlu0 %421
  %v427 = vmul.f32 %v379, %v416
  %v428 = vmul.f32 %v381, %v418
  %v429 = vmul.f32 %v383, %v420
  %v430 = vmul.f32 %v385, %v422
  %435 = vrot.lane.b32.xlu0 %v427, 32
  %v436 = vpop.permute.xlu0 %435
  %437 = vrot.lane.b32.xlu0 %v428, 32
  %v438 = vpop.permute.xlu0 %437
  %439 = vrot.lane.b32.xlu0 %v429, 32
  %v440 = vpop.permute.xlu0 %439
  %441 = vrot.lane.b32.xlu0 %v430, 32
  %v442 = vpop.permute.xlu0 %441
  %v447 = vadd.f32 %v407, %v436
  %v448 = vadd.f32 %v408, %v438
  %v449 = vadd.f32 %v409, %v440
  %v450 = vadd.f32 %v410, %v442
  %v451 = vtanh.pop %v447
  %v452 = vtanh.pop %v448
  %v453 = vtanh.pop %v449
  %v454 = vtanh.pop %v450
  %459 = vrot.lane.b32.xlu0 %v451, 64
  %v460 = vpop.permute.xlu0 %459
  %461 = vrot.lane.b32.xlu0 %v452, 64
  %v462 = vpop.permute.xlu0 %461
  %463 = vrot.lane.b32.xlu0 %v453, 64
  %v464 = vpop.permute.xlu0 %463
  %465 = vrot.lane.b32.xlu0 %v454, 64
  %v466 = vpop.permute.xlu0 %465
  %v471 = vmul.f32 %v379, %v460
  %v472 = vmul.f32 %v381, %v462
  %v473 = vmul.f32 %v383, %v464
  %v474 = vmul.f32 %v385, %v466
  %v479 = vrot.slane %v448, 7
  %v480 = vsel %vm215, %v479, %v447
  %v481 = vrot.slane %v449, 6
  %v482 = vsel %vm218, %v481, %v480
  %v483 = vrot.slane %v450, 5
  %v484 = vsel %vm221, %v483, %v482
  %485 = vrot.lane.b32.xlu0 %v484, 96
  %v486 = vpop.permute.xlu0 %485
  %488 = vst.msk [vmem:[#allocation3] sm:$0xf] %vm226, %v486
  %v493 = vrot.slane %v472, 7
  %v494 = vsel %vm215, %v493, %v471
  %v495 = vrot.slane %v473, 6
  %v496 = vsel %vm218, %v495, %v494
  %v497 = vrot.slane %v474, 5
  %v498 = vsel %vm221, %v497, %v496
  %499 = vrot.lane.b32.xlu0 %v498, 32
  %v500 = vpop.permute.xlu0 %499
  %502 = vst.msk [vmem:[#allocation2] sm:$0xf] %vm226, %v500
  %v503 = vpack.c.bf16 %v471, %v471
  %v504 = vpack.c.bf16 %v472, %v472
  %v505 = vpack.c.bf16 %v473, %v473
  %v506 = vpack.c.bf16 %v474, %v474
  %v511 = vunpack.c.l.b16 %v503
  %v512 = vunpack.c.l.b16 %v504
  %v513 = vunpack.c.l.b16 %v505
  %v514 = vunpack.c.l.b16 %v506
  %v515 = vpack.c.b16 %v511, %v511
  %v516 = vpack.c.b16 %v512, %v512
  %v517 = vpack.c.b16 %v513, %v513
  %v518 = vpack.c.b16 %v514, %v514
  %v520 = vshll.u32 %v515, 16
  %v523 = vshll.u32 %v516, 16
  %v526 = vshll.u32 %v517, 16
  %v529 = vshll.u32 %v518, 16
  %531 = vrot.lane.b32.xlu0 %v520, 32
  %v532 = vpop.permute.xlu0 %531
  %533 = vrot.lane.b32.xlu0 %v523, 32
  %v534 = vpop.permute.xlu0 %533
  %535 = vrot.lane.b32.xlu0 %v526, 32
  %v536 = vpop.permute.xlu0 %535
  %537 = vrot.lane.b32.xlu0 %v529, 32
  %v538 = vpop.permute.xlu0 %537
  %vm543 = vsmask.f32 7938
  %vm544 = vmand %vm270, %vm543
  %v545 = vld [vmem:[%s2] sm:$0x1]
  %v546 = vsel %vm544, %v532, %v545
  %547 = vst [vmem:[%s2] sm:$0x1] %v546
  %v548 = vld [vmem:[%s2 + $0x4] sm:$0x1]
  %v549 = vsel %vm544, %v534, %v548
  %550 = vst [vmem:[%s2 + $0x4] sm:$0x1] %v549
  %v551 = vld [vmem:[%s2 + $0x8] sm:$0x1]
  %v552 = vsel %vm544, %v536, %v551
  %553 = vst [vmem:[%s2 + $0x8] sm:$0x1] %v552
  %v554 = vld [vmem:[%s2 + $0xc] sm:$0x1]
  %v555 = vsel %vm544, %v538, %v554
  %556 = vst [vmem:[%s2 + $0xc] sm:$0x1] %v555
  %v557 = vld [vmem:[#allocation2] sm:$0xf]
  %v558 = vpack.c.bf16 %v557, %v557
  %v559 = vld [vmem:[%s0 + $0x2] sm:$0x1]
  %v560 = vld [vmem:[%s0 + $0xa] sm:$0x1]
  %v561 = vld [vmem:[%s0 + $0x12] sm:$0x1]
  %v562 = vld [vmem:[%s0 + $0x1a] sm:$0x1]
  %v563 = vld [vmem:[%s1] sm:$0xf]
  %v564 = vld [vmem:[%s1 + $0x4] sm:$0xf]
  %v565 = vld [vmem:[%s1 + $0x8] sm:$0xf]
  %v566 = vld [vmem:[%s1 + $0xc] sm:$0xf]
  %v571 = vunpack.c.l.b16 %v563
  %v572 = vunpack.c.l.b16 %v564
  %v573 = vunpack.c.l.b16 %v565
  %v574 = vunpack.c.l.b16 %v566
  %v575 = vpack.c.b16 %v572, %v571
  %v576 = vpack.c.b16 %v574, %v573
  %v580 = vsel %vm41, %v558, 0
  %582 = vmatprep.subr.bf16.mxu0 0
  %583 = vmatpush1.bf16.msra.mxu0 0
  %584 = vmatprep.subr.bf16.mxu0 0
  %585 = vmatpush1.bf16.msra.mxu0 0
  %586 = vmatprep.subr.bf16.mxu0 0
  %587 = vmatpush1.bf16.msra.mxu0 0
  %588 = vmatprep.subr.bf16.mxu0 0
  %589 = vmatpush1.bf16.msra.mxu0 0
  %590 = vmatprep.subr.bf16.mxu0 0
  %591 = vmatpush1.bf16.msra.mxu0 0
  %592 = vmatprep.subr.bf16.mxu0 0
  %593 = vmatpush1.bf16.msra.mxu0 0
  %594 = vmatprep.subr.bf16.mxu0 0
  %595 = vmatpush1.bf16.msra.mxu0 %v576
  %596 = vmatprep.subr.bf16.mxu0 0
  %597 = vmatpush1.bf16.msra.mxu0 %v575
  %598 = vmatprep.subr.bf16.mxu0 0
  %599 = vmatpush2.bf16.msra.mxu0 0
  %600 = vmatprep.subr.bf16.mxu0 0
  %601 = vmatpush2.bf16.msra.mxu0 0
  %602 = vmatprep.subr.bf16.mxu0 0
  %603 = vmatpush2.bf16.msra.mxu0 0
  %604 = vmatprep.subr.bf16.mxu0 0
  %605 = vmatpush2.bf16.msra.mxu0 0
  %606 = vmatprep.subr.bf16.mxu0 0
  %607 = vmatpush2.bf16.msra.mxu0 0
  %608 = vmatprep.subr.bf16.mxu0 0
  %609 = vmatpush2.bf16.msra.mxu0 0
  %610 = vmatprep.subr.bf16.mxu0 0
  %611 = vmatpush2.bf16.msra.mxu0 0
  %612 = vmatprep.subr.bf16.mxu0 0
  %613 = vmatpush2.bf16.msra.mxu0 0
  %614 = vmatprep.mubr.bf16.mxu0 0
  %615 = vmatmul.mubr.bf16.gmra.mxu0 %v580
  %v616 = vpop.f32.mrf.mxu0
  %v617 = vadd.f32 0.0, %v616
  %v618 = vpop.f32.mrf.mxu0
  %v619 = vpop.f32.mrf.mxu0
  %v620 = vpop.f32.mrf.mxu0
  %621 = vdwg.mxu0
  %v623 = vrot.slane %v617, 1
  %v624 = vrot.slane %v617, 2
  %v625 = vrot.slane %v617, 3
  %v630 = vadd.f32 %v559, %v617
  %v631 = vadd.f32 %v560, %v623
  %v632 = vadd.f32 %v561, %v624
  %v633 = vadd.f32 %v562, %v625
  %v634 = vxor.u32 %v630, 2147483648
  %v635 = vxor.u32 %v631, 2147483648
  %v636 = vxor.u32 %v632, 2147483648
  %v637 = vxor.u32 %v633, 2147483648
  %v638 = vmul.f32 %v634, 1.442695
  %v639 = vpow.pop %v638
  %v640 = vmul.f32 %v635, 1.442695
  %v641 = vpow.pop %v640
  %v642 = vmul.f32 %v636, 1.442695
  %v643 = vpow.pop %v642
  %v644 = vmul.f32 %v637, 1.442695
  %v645 = vpow.pop %v644
  %v646 = vadd.f32 %v639, 1.0
  %v647 = vadd.f32 %v641, 1.0
  %v648 = vadd.f32 %v643, 1.0
  %v649 = vadd.f32 %v645, 1.0
  %v650 = vrcp.pop %v646
  %v651 = vmul.f32 1.0, %v650
  %v652 = vrcp.pop %v647
  %v653 = vmul.f32 1.0, %v652
  %v654 = vrcp.pop %v648
  %v655 = vmul.f32 1.0, %v654
  %v656 = vrcp.pop %v649
  %v657 = vmul.f32 1.0, %v656
  %v658 = vtanh.pop %v630
  %v659 = vtanh.pop %v631
  %v660 = vtanh.pop %v632
  %v661 = vtanh.pop %v633
  %v662 = vld [vmem:[#allocation3] sm:$0xf]
  %v664 = vrot.slane %v662, 1
  %v665 = vrot.slane %v662, 2
  %v666 = vrot.slane %v662, 3
  %667 = vrot.lane.b32.xlu0 %v662, 32
  %v668 = vpop.permute.xlu0 %667
  %669 = vrot.lane.b32.xlu0 %v664, 32
  %v670 = vpop.permute.xlu0 %669
  %671 = vrot.lane.b32.xlu0 %v665, 32
  %v672 = vpop.permute.xlu0 %671
  %673 = vrot.lane.b32.xlu0 %v666, 32
  %v674 = vpop.permute.xlu0 %673
  %v679 = vmul.f32 %v651, %v668
  %v680 = vmul.f32 %v653, %v670
  %v681 = vmul.f32 %v655, %v672
  %v682 = vmul.f32 %v657, %v674
  %687 = vrot.lane.b32.xlu0 %v658, 64
  %v688 = vpop.permute.xlu0 %687
  %689 = vrot.lane.b32.xlu0 %v659, 64
  %v690 = vpop.permute.xlu0 %689
  %691 = vrot.lane.b32.xlu0 %v660, 64
  %v692 = vpop.permute.xlu0 %691
  %693 = vrot.lane.b32.xlu0 %v661, 64
  %v694 = vpop.permute.xlu0 %693
  %v699 = vmul.f32 %v651, %v688
  %v700 = vmul.f32 %v653, %v690
  %v701 = vmul.f32 %v655, %v692
  %v702 = vmul.f32 %v657, %v694
  %707 = vrot.lane.b32.xlu0 %v699, 32
  %v708 = vpop.permute.xlu0 %707
  %709 = vrot.lane.b32.xlu0 %v700, 32
  %v710 = vpop.permute.xlu0 %709
  %711 = vrot.lane.b32.xlu0 %v701, 32
  %v712 = vpop.permute.xlu0 %711
  %713 = vrot.lane.b32.xlu0 %v702, 32
  %v714 = vpop.permute.xlu0 %713
  %v719 = vadd.f32 %v679, %v708
  %v720 = vadd.f32 %v680, %v710
  %v721 = vadd.f32 %v681, %v712
  %v722 = vadd.f32 %v682, %v714
  %v723 = vtanh.pop %v719
  %v724 = vtanh.pop %v720
  %v725 = vtanh.pop %v721
  %v726 = vtanh.pop %v722
  %731 = vrot.lane.b32.xlu0 %v723, 64
  %v732 = vpop.permute.xlu0 %731
  %733 = vrot.lane.b32.xlu0 %v724, 64
  %v734 = vpop.permute.xlu0 %733
  %735 = vrot.lane.b32.xlu0 %v725, 64
  %v736 = vpop.permute.xlu0 %735
  %737 = vrot.lane.b32.xlu0 %v726, 64
  %v738 = vpop.permute.xlu0 %737
  %v743 = vmul.f32 %v651, %v732
  %v744 = vmul.f32 %v653, %v734
  %v745 = vmul.f32 %v655, %v736
  %v746 = vmul.f32 %v657, %v738
  %v751 = vrot.slane %v720, 7
  %v752 = vsel %vm215, %v751, %v719
  %v753 = vrot.slane %v721, 6
  %v754 = vsel %vm218, %v753, %v752
  %v755 = vrot.slane %v722, 5
  %v756 = vsel %vm221, %v755, %v754
  %757 = vrot.lane.b32.xlu0 %v756, 96
  %v758 = vpop.permute.xlu0 %757
  %760 = vst.msk [vmem:[#allocation3] sm:$0xf] %vm226, %v758
  %v765 = vrot.slane %v744, 7
  %v766 = vsel %vm215, %v765, %v743
  %v767 = vrot.slane %v745, 6
  %v768 = vsel %vm218, %v767, %v766
  %v769 = vrot.slane %v746, 5
  %v770 = vsel %vm221, %v769, %v768
  %771 = vrot.lane.b32.xlu0 %v770, 32
  %v772 = vpop.permute.xlu0 %771
  %774 = vst.msk [vmem:[#allocation2] sm:$0xf] %vm226, %v772
  %v775 = vpack.c.bf16 %v743, %v743
  %v776 = vpack.c.bf16 %v744, %v744
  %v777 = vpack.c.bf16 %v745, %v745
  %v778 = vpack.c.bf16 %v746, %v746
  %v783 = vunpack.c.l.b16 %v775
  %v784 = vunpack.c.l.b16 %v776
  %v785 = vunpack.c.l.b16 %v777
  %v786 = vunpack.c.l.b16 %v778
  %v787 = vpack.c.b16 %v783, %v783
  %v788 = vpack.c.b16 %v784, %v784
  %v789 = vpack.c.b16 %v785, %v785
  %v790 = vpack.c.b16 %v786, %v786
  %v791 = vrot.slane %v787, 7
  %v792 = vrot.slane %v788, 7
  %v793 = vrot.slane %v789, 7
  %v794 = vrot.slane %v790, 7
  %795 = vrot.lane.b32.xlu0 %v791, 32
  %v796 = vpop.permute.xlu0 %795
  %797 = vrot.lane.b32.xlu0 %v792, 32
  %v798 = vpop.permute.xlu0 %797
  %799 = vrot.lane.b32.xlu0 %v793, 32
  %v800 = vpop.permute.xlu0 %799
  %801 = vrot.lane.b32.xlu0 %v794, 32
  %v802 = vpop.permute.xlu0 %801
  %vm807 = vcmask 254977
  %vm808 = vsmask.f32 1280
  %vm809 = vmand %vm807, %vm808
  %v810 = vld [vmem:[%s2] sm:$0x2]
  %v811 = vsel %vm809, %v796, %v810
  %812 = vst [vmem:[%s2] sm:$0x2] %v811
  %v813 = vld [vmem:[%s2 + $0x4] sm:$0x2]
  %v814 = vsel %vm809, %v798, %v813
  %815 = vst [vmem:[%s2 + $0x4] sm:$0x2] %v814
  %v816 = vld [vmem:[%s2 + $0x8] sm:$0x2]
  %v817 = vsel %vm809, %v800, %v816
  %818 = vst [vmem:[%s2 + $0x8] sm:$0x2] %v817
  %v819 = vld [vmem:[%s2 + $0xc] sm:$0x2]
  %v820 = vsel %vm809, %v802, %v819
  %821 = vst [vmem:[%s2 + $0xc] sm:$0x2] %v820
  %v822 = vld [vmem:[#allocation2] sm:$0xf]
  %v823 = vpack.c.bf16 %v822, %v822
  %v824 = vld [vmem:[%s0 + $0x3] sm:$0x1]
  %v825 = vld [vmem:[%s0 + $0xb] sm:$0x1]
  %v826 = vld [vmem:[%s0 + $0x13] sm:$0x1]
  %v827 = vld [vmem:[%s0 + $0x1b] sm:$0x1]
  %v828 = vld [vmem:[%s1] sm:$0xf]
  %v829 = vld [vmem:[%s1 + $0x4] sm:$0xf]
  %v830 = vld [vmem:[%s1 + $0x8] sm:$0xf]
  %v831 = vld [vmem:[%s1 + $0xc] sm:$0xf]
  %v836 = vunpack.c.l.b16 %v828
  %v837 = vunpack.c.l.b16 %v829
  %v838 = vunpack.c.l.b16 %v830
  %v839 = vunpack.c.l.b16 %v831
  %v840 = vpack.c.b16 %v837, %v836
  %v841 = vpack.c.b16 %v839, %v838
  %v845 = vsel %vm41, %v823, 0
  %847 = vmatprep.subr.bf16.mxu0 0
  %848 = vmatpush1.bf16.msra.mxu0 0
  %849 = vmatprep.subr.bf16.mxu0 0
  %850 = vmatpush1.bf16.msra.mxu0 0
  %851 = vmatprep.subr.bf16.mxu0 0
  %852 = vmatpush1.bf16.msra.mxu0 0
  %853 = vmatprep.subr.bf16.mxu0 0
  %854 = vmatpush1.bf16.msra.mxu0 0
  %855 = vmatprep.subr.bf16.mxu0 0
  %856 = vmatpush1.bf16.msra.mxu0 0
  %857 = vmatprep.subr.bf16.mxu0 0
  %858 = vmatpush1.bf16.msra.mxu0 0
  %859 = vmatprep.subr.bf16.mxu0 0
  %860 = vmatpush1.bf16.msra.mxu0 %v841
  %861 = vmatprep.subr.bf16.mxu0 0
  %862 = vmatpush1.bf16.msra.mxu0 %v840
  %863 = vmatprep.subr.bf16.mxu0 0
  %864 = vmatpush2.bf16.msra.mxu0 0
  %865 = vmatprep.subr.bf16.mxu0 0
  %866 = vmatpush2.bf16.msra.mxu0 0
  %867 = vmatprep.subr.bf16.mxu0 0
  %868 = vmatpush2.bf16.msra.mxu0 0
  %869 = vmatprep.subr.bf16.mxu0 0
  %870 = vmatpush2.bf16.msra.mxu0 0
  %871 = vmatprep.subr.bf16.mxu0 0
  %872 = vmatpush2.bf16.msra.mxu0 0
  %873 = vmatprep.subr.bf16.mxu0 0
  %874 = vmatpush2.bf16.msra.mxu0 0
  %875 = vmatprep.subr.bf16.mxu0 0
  %876 = vmatpush2.bf16.msra.mxu0 0
  %877 = vmatprep.subr.bf16.mxu0 0
  %878 = vmatpush2.bf16.msra.mxu0 0
  %879 = vmatprep.mubr.bf16.mxu0 0
  %880 = vmatmul.mubr.bf16.gmra.mxu0 %v845
  %v881 = vpop.f32.mrf.mxu0
  %v882 = vadd.f32 0.0, %v881
  %v883 = vpop.f32.mrf.mxu0
  %v884 = vpop.f32.mrf.mxu0
  %v885 = vpop.f32.mrf.mxu0
  %886 = vdwg.mxu0
  %v888 = vrot.slane %v882, 1
  %v889 = vrot.slane %v882, 2
  %v890 = vrot.slane %v882, 3
  %v895 = vadd.f32 %v824, %v882
  %v896 = vadd.f32 %v825, %v888
  %v897 = vadd.f32 %v826, %v889
  %v898 = vadd.f32 %v827, %v890
  %v899 = vxor.u32 %v895, 2147483648
  %v900 = vxor.u32 %v896, 2147483648
  %v901 = vxor.u32 %v897, 2147483648
  %v902 = vxor.u32 %v898, 2147483648
  %v903 = vmul.f32 %v899, 1.442695
  %v904 = vpow.pop %v903
  %v905 = vmul.f32 %v900, 1.442695
  %v906 = vpow.pop %v905
  %v907 = vmul.f32 %v901, 1.442695
  %v908 = vpow.pop %v907
  %v909 = vmul.f32 %v902, 1.442695
  %v910 = vpow.pop %v909
  %v911 = vadd.f32 %v904, 1.0
  %v912 = vadd.f32 %v906, 1.0
  %v913 = vadd.f32 %v908, 1.0
  %v914 = vadd.f32 %v910, 1.0
  %v915 = vrcp.pop %v911
  %v916 = vmul.f32 1.0, %v915
  %v917 = vrcp.pop %v912
  %v918 = vmul.f32 1.0, %v917
  %v919 = vrcp.pop %v913
  %v920 = vmul.f32 1.0, %v919
  %v921 = vrcp.pop %v914
  %v922 = vmul.f32 1.0, %v921
  %v923 = vtanh.pop %v895
  %v924 = vtanh.pop %v896
  %v925 = vtanh.pop %v897
  %v926 = vtanh.pop %v898
  %v927 = vld [vmem:[#allocation3] sm:$0xf]
  %v929 = vrot.slane %v927, 1
  %v930 = vrot.slane %v927, 2
  %v931 = vrot.slane %v927, 3
  %932 = vrot.lane.b32.xlu0 %v927, 32
  %v933 = vpop.permute.xlu0 %932
  %934 = vrot.lane.b32.xlu0 %v929, 32
  %v935 = vpop.permute.xlu0 %934
  %936 = vrot.lane.b32.xlu0 %v930, 32
  %v937 = vpop.permute.xlu0 %936
  %938 = vrot.lane.b32.xlu0 %v931, 32
  %v939 = vpop.permute.xlu0 %938
  %v944 = vmul.f32 %v916, %v933
  %v945 = vmul.f32 %v918, %v935
  %v946 = vmul.f32 %v920, %v937
  %v947 = vmul.f32 %v922, %v939
  %952 = vrot.lane.b32.xlu0 %v923, 64
  %v953 = vpop.permute.xlu0 %952
  %954 = vrot.lane.b32.xlu0 %v924, 64
  %v955 = vpop.permute.xlu0 %954
  %956 = vrot.lane.b32.xlu0 %v925, 64
  %v957 = vpop.permute.xlu0 %956
  %958 = vrot.lane.b32.xlu0 %v926, 64
  %v959 = vpop.permute.xlu0 %958
  %v964 = vmul.f32 %v916, %v953
  %v965 = vmul.f32 %v918, %v955
  %v966 = vmul.f32 %v920, %v957
  %v967 = vmul.f32 %v922, %v959
  %972 = vrot.lane.b32.xlu0 %v964, 32
  %v973 = vpop.permute.xlu0 %972
  %974 = vrot.lane.b32.xlu0 %v965, 32
  %v975 = vpop.permute.xlu0 %974
  %976 = vrot.lane.b32.xlu0 %v966, 32
  %v977 = vpop.permute.xlu0 %976
  %978 = vrot.lane.b32.xlu0 %v967, 32
  %v979 = vpop.permute.xlu0 %978
  %v984 = vadd.f32 %v944, %v973
  %v985 = vadd.f32 %v945, %v975
  %v986 = vadd.f32 %v946, %v977
  %v987 = vadd.f32 %v947, %v979
  %v988 = vtanh.pop %v984
  %v989 = vtanh.pop %v985
  %v990 = vtanh.pop %v986
  %v991 = vtanh.pop %v987
  %996 = vrot.lane.b32.xlu0 %v988, 64
  %v997 = vpop.permute.xlu0 %996
  %998 = vrot.lane.b32.xlu0 %v989, 64
  %v999 = vpop.permute.xlu0 %998
  %1000 = vrot.lane.b32.xlu0 %v990, 64
  %v1001 = vpop.permute.xlu0 %1000
  %1002 = vrot.lane.b32.xlu0 %v991, 64
  %v1003 = vpop.permute.xlu0 %1002
  %v1008 = vmul.f32 %v916, %v997
  %v1009 = vmul.f32 %v918, %v999
  %v1010 = vmul.f32 %v920, %v1001
  %v1011 = vmul.f32 %v922, %v1003
  %v1016 = vrot.slane %v985, 7
  %v1017 = vsel %vm215, %v1016, %v984
  %v1018 = vrot.slane %v986, 6
  %v1019 = vsel %vm218, %v1018, %v1017
  %v1020 = vrot.slane %v987, 5
  %v1021 = vsel %vm221, %v1020, %v1019
  %1022 = vrot.lane.b32.xlu0 %v1021, 96
  %v1023 = vpop.permute.xlu0 %1022
  %1025 = vst.msk [vmem:[#allocation3] sm:$0xf] %vm226, %v1023
  %v1030 = vrot.slane %v1009, 7
  %v1031 = vsel %vm215, %v1030, %v1008
  %v1032 = vrot.slane %v1010, 6
  %v1033 = vsel %vm218, %v1032, %v1031
  %v1034 = vrot.slane %v1011, 5
  %v1035 = vsel %vm221, %v1034, %v1033
  %1036 = vrot.lane.b32.xlu0 %v1035, 32
  %v1037 = vpop.permute.xlu0 %1036
  %1039 = vst.msk [vmem:[#allocation2] sm:$0xf] %vm226, %v1037
  %v1040 = vpack.c.bf16 %v1008, %v1008
  %v1041 = vpack.c.bf16 %v1009, %v1009
  %v1042 = vpack.c.bf16 %v1010, %v1010
  %v1043 = vpack.c.bf16 %v1011, %v1011
  %v1048 = vunpack.c.l.b16 %v1040
  %v1049 = vunpack.c.l.b16 %v1041
  %v1050 = vunpack.c.l.b16 %v1042
  %v1051 = vunpack.c.l.b16 %v1043
  %v1052 = vpack.c.b16 %v1048, %v1048
  %v1053 = vpack.c.b16 %v1049, %v1049
  %v1054 = vpack.c.b16 %v1050, %v1050
  %v1055 = vpack.c.b16 %v1051, %v1051
  %v1057 = vshll.u32 %v1052, 16
  %v1059 = vrot.slane %v1057, 7
  %v1061 = vshll.u32 %v1053, 16
  %v1063 = vrot.slane %v1061, 7
  %v1065 = vshll.u32 %v1054, 16
  %v1067 = vrot.slane %v1065, 7
  %v1069 = vshll.u32 %v1055, 16
  %v1071 = vrot.slane %v1069, 7
  %1072 = vrot.lane.b32.xlu0 %v1059, 32
  %v1073 = vpop.permute.xlu0 %1072
  %1074 = vrot.lane.b32.xlu0 %v1063, 32
  %v1075 = vpop.permute.xlu0 %1074
  %1076 = vrot.lane.b32.xlu0 %v1067, 32
  %v1077 = vpop.permute.xlu0 %1076
  %1078 = vrot.lane.b32.xlu0 %v1071, 32
  %v1079 = vpop.permute.xlu0 %1078
  %vm1084 = vsmask.f32 7942
  %vm1085 = vmand %vm807, %vm1084
  %v1086 = vld [vmem:[%s2] sm:$0x2]
  %v1087 = vsel %vm1085, %v1073, %v1086
  %1088 = vst [vmem:[%s2] sm:$0x2] %v1087
  %v1089 = vld [vmem:[%s2 + $0x4] sm:$0x2]
  %v1090 = vsel %vm1085, %v1075, %v1089
  %1091 = vst [vmem:[%s2 + $0x4] sm:$0x2] %v1090
  %v1092 = vld [vmem:[%s2 + $0x8] sm:$0x2]
  %v1093 = vsel %vm1085, %v1077, %v1092
  %1094 = vst [vmem:[%s2 + $0x8] sm:$0x2] %v1093
  %v1095 = vld [vmem:[%s2 + $0xc] sm:$0x2]
  %v1096 = vsel %vm1085, %v1079, %v1095
  %1097 = vst [vmem:[%s2 + $0xc] sm:$0x2] %v1096
  %v1098 = vld [vmem:[#allocation2] sm:$0xf]
  %v1099 = vpack.c.bf16 %v1098, %v1098
  %v1100 = vld [vmem:[%s0 + $0x4] sm:$0x1]
  %v1101 = vld [vmem:[%s0 + $0xc] sm:$0x1]
  %v1102 = vld [vmem:[%s0 + $0x14] sm:$0x1]
  %v1103 = vld [vmem:[%s0 + $0x1c] sm:$0x1]
  %v1104 = vld [vmem:[%s1] sm:$0xf]
  %v1105 = vld [vmem:[%s1 + $0x4] sm:$0xf]
  %v1106 = vld [vmem:[%s1 + $0x8] sm:$0xf]
  %v1107 = vld [vmem:[%s1 + $0xc] sm:$0xf]
  %v1112 = vunpack.c.l.b16 %v1104
  %v1113 = vunpack.c.l.b16 %v1105
  %v1114 = vunpack.c.l.b16 %v1106
  %v1115 = vunpack.c.l.b16 %v1107
  %v1116 = vpack.c.b16 %v1113, %v1112
  %v1117 = vpack.c.b16 %v1115, %v1114
  %v1121 = vsel %vm41, %v1099, 0
  %1123 = vmatprep.subr.bf16.mxu0 0
  %1124 = vmatpush1.bf16.msra.mxu0 0
  %1125 = vmatprep.subr.bf16.mxu0 0
  %1126 = vmatpush1.bf16.msra.mxu0 0
  %1127 = vmatprep.subr.bf16.mxu0 0
  %1128 = vmatpush1.bf16.msra.mxu0 0
  %1129 = vmatprep.subr.bf16.mxu0 0
  %1130 = vmatpush1.bf16.msra.mxu0 0
  %1131 = vmatprep.subr.bf16.mxu0 0
  %1132 = vmatpush1.bf16.msra.mxu0 0
  %1133 = vmatprep.subr.bf16.mxu0 0
  %1134 = vmatpush1.bf16.msra.mxu0 0
  %1135 = vmatprep.subr.bf16.mxu0 0
  %1136 = vmatpush1.bf16.msra.mxu0 %v1117
  %1137 = vmatprep.subr.bf16.mxu0 0
  %1138 = vmatpush1.bf16.msra.mxu0 %v1116
  %1139 = vmatprep.subr.bf16.mxu0 0
  %1140 = vmatpush2.bf16.msra.mxu0 0
  %1141 = vmatprep.subr.bf16.mxu0 0
  %1142 = vmatpush2.bf16.msra.mxu0 0
  %1143 = vmatprep.subr.bf16.mxu0 0
  %1144 = vmatpush2.bf16.msra.mxu0 0
  %1145 = vmatprep.subr.bf16.mxu0 0
  %1146 = vmatpush2.bf16.msra.mxu0 0
  %1147 = vmatprep.subr.bf16.mxu0 0
  %1148 = vmatpush2.bf16.msra.mxu0 0
  %1149 = vmatprep.subr.bf16.mxu0 0
  %1150 = vmatpush2.bf16.msra.mxu0 0
  %1151 = vmatprep.subr.bf16.mxu0 0
  %1152 = vmatpush2.bf16.msra.mxu0 0
  %1153 = vmatprep.subr.bf16.mxu0 0
  %1154 = vmatpush2.bf16.msra.mxu0 0
  %1155 = vmatprep.mubr.bf16.mxu0 0
  %1156 = vmatmul.mubr.bf16.gmra.mxu0 %v1121
  %v1157 = vpop.f32.mrf.mxu0
  %v1158 = vadd.f32 0.0, %v1157
  %v1159 = vpop.f32.mrf.mxu0
  %v1160 = vpop.f32.mrf.mxu0
  %v1161 = vpop.f32.mrf.mxu0
  %1162 = vdwg.mxu0
  %v1164 = vrot.slane %v1158, 1
  %v1165 = vrot.slane %v1158, 2
  %v1166 = vrot.slane %v1158, 3
  %v1171 = vadd.f32 %v1100, %v1158
  %v1172 = vadd.f32 %v1101, %v1164
  %v1173 = vadd.f32 %v1102, %v1165
  %v1174 = vadd.f32 %v1103, %v1166
  %v1175 = vxor.u32 %v1171, 2147483648
  %v1176 = vxor.u32 %v1172, 2147483648
  %v1177 = vxor.u32 %v1173, 2147483648
  %v1178 = vxor.u32 %v1174, 2147483648
  %v1179 = vmul.f32 %v1175, 1.442695
  %v1180 = vpow.pop %v1179
  %v1181 = vmul.f32 %v1176, 1.442695
  %v1182 = vpow.pop %v1181
  %v1183 = vmul.f32 %v1177, 1.442695
  %v1184 = vpow.pop %v1183
  %v1185 = vmul.f32 %v1178, 1.442695
  %v1186 = vpow.pop %v1185
  %v1187 = vadd.f32 %v1180, 1.0
  %v1188 = vadd.f32 %v1182, 1.0
  %v1189 = vadd.f32 %v1184, 1.0
  %v1190 = vadd.f32 %v1186, 1.0
  %v1191 = vrcp.pop %v1187
  %v1192 = vmul.f32 1.0, %v1191
  %v1193 = vrcp.pop %v1188
  %v1194 = vmul.f32 1.0, %v1193
  %v1195 = vrcp.pop %v1189
  %v1196 = vmul.f32 1.0, %v1195
  %v1197 = vrcp.pop %v1190
  %v1198 = vmul.f32 1.0, %v1197
  %v1199 = vtanh.pop %v1171
  %v1200 = vtanh.pop %v1172
  %v1201 = vtanh.pop %v1173
  %v1202 = vtanh.pop %v1174
  %v1203 = vld [vmem:[#allocation3] sm:$0xf]
  %v1205 = vrot.slane %v1203, 1
  %v1206 = vrot.slane %v1203, 2
  %v1207 = vrot.slane %v1203, 3
  %1208 = vrot.lane.b32.xlu0 %v1203, 32
  %v1209 = vpop.permute.xlu0 %1208
  %1210 = vrot.lane.b32.xlu0 %v1205, 32
  %v1211 = vpop.permute.xlu0 %1210
  %1212 = vrot.lane.b32.xlu0 %v1206, 32
  %v1213 = vpop.permute.xlu0 %1212
  %1214 = vrot.lane.b32.xlu0 %v1207, 32
  %v1215 = vpop.permute.xlu0 %1214
  %v1220 = vmul.f32 %v1192, %v1209
  %v1221 = vmul.f32 %v1194, %v1211
  %v1222 = vmul.f32 %v1196, %v1213
  %v1223 = vmul.f32 %v1198, %v1215
  %1228 = vrot.lane.b32.xlu0 %v1199, 64
  %v1229 = vpop.permute.xlu0 %1228
  %1230 = vrot.lane.b32.xlu0 %v1200, 64
  %v1231 = vpop.permute.xlu0 %1230
  %1232 = vrot.lane.b32.xlu0 %v1201, 64
  %v1233 = vpop.permute.xlu0 %1232
  %1234 = vrot.lane.b32.xlu0 %v1202, 64
  %v1235 = vpop.permute.xlu0 %1234
  %v1240 = vmul.f32 %v1192, %v1229
  %v1241 = vmul.f32 %v1194, %v1231
  %v1242 = vmul.f32 %v1196, %v1233
  %v1243 = vmul.f32 %v1198, %v1235
  %1248 = vrot.lane.b32.xlu0 %v1240, 32
  %v1249 = vpop.permute.xlu0 %1248
  %1250 = vrot.lane.b32.xlu0 %v1241, 32
  %v1251 = vpop.permute.xlu0 %1250
  %1252 = vrot.lane.b32.xlu0 %v1242, 32
  %v1253 = vpop.permute.xlu0 %1252
  %1254 = vrot.lane.b32.xlu0 %v1243, 32
  %v1255 = vpop.permute.xlu0 %1254
  %v1260 = vadd.f32 %v1220, %v1249
  %v1261 = vadd.f32 %v1221, %v1251
  %v1262 = vadd.f32 %v1222, %v1253
  %v1263 = vadd.f32 %v1223, %v1255
  %v1264 = vtanh.pop %v1260
  %v1265 = vtanh.pop %v1261
  %v1266 = vtanh.pop %v1262
  %v1267 = vtanh.pop %v1263
  %1272 = vrot.lane.b32.xlu0 %v1264, 64
  %v1273 = vpop.permute.xlu0 %1272
  %1274 = vrot.lane.b32.xlu0 %v1265, 64
  %v1275 = vpop.permute.xlu0 %1274
  %1276 = vrot.lane.b32.xlu0 %v1266, 64
  %v1277 = vpop.permute.xlu0 %1276
  %1278 = vrot.lane.b32.xlu0 %v1267, 64
  %v1279 = vpop.permute.xlu0 %1278
  %v1284 = vmul.f32 %v1192, %v1273
  %v1285 = vmul.f32 %v1194, %v1275
  %v1286 = vmul.f32 %v1196, %v1277
  %v1287 = vmul.f32 %v1198, %v1279
  %v1292 = vrot.slane %v1261, 7
  %v1293 = vsel %vm215, %v1292, %v1260
  %v1294 = vrot.slane %v1262, 6
  %v1295 = vsel %vm218, %v1294, %v1293
  %v1296 = vrot.slane %v1263, 5
  %v1297 = vsel %vm221, %v1296, %v1295
  %1298 = vrot.lane.b32.xlu0 %v1297, 96
  %v1299 = vpop.permute.xlu0 %1298
  %1301 = vst.msk [vmem:[#allocation3] sm:$0xf] %vm226, %v1299
  %v1306 = vrot.slane %v1285, 7
  %v1307 = vsel %vm215, %v1306, %v1284
  %v1308 = vrot.slane %v1286, 6
  %v1309 = vsel %vm218, %v1308, %v1307
  %v1310 = vrot.slane %v1287, 5
  %v1311 = vsel %vm221, %v1310, %v1309
  %1312 = vrot.lane.b32.xlu0 %v1311, 32
  %v1313 = vpop.permute.xlu0 %1312
  %1315 = vst.msk [vmem:[#allocation2] sm:$0xf] %vm226, %v1313
  %v1316 = vpack.c.bf16 %v1284, %v1284
  %v1317 = vpack.c.bf16 %v1285, %v1285
  %v1318 = vpack.c.bf16 %v1286, %v1286
  %v1319 = vpack.c.bf16 %v1287, %v1287
  %v1324 = vunpack.c.l.b16 %v1316
  %v1325 = vunpack.c.l.b16 %v1317
  %v1326 = vunpack.c.l.b16 %v1318
  %v1327 = vunpack.c.l.b16 %v1319
  %v1328 = vpack.c.b16 %v1324, %v1324
  %v1329 = vpack.c.b16 %v1325, %v1325
  %v1330 = vpack.c.b16 %v1326, %v1326
  %v1331 = vpack.c.b16 %v1327, %v1327
  %v1332 = vrot.slane %v1328, 6
  %v1333 = vrot.slane %v1329, 6
  %v1334 = vrot.slane %v1330, 6
  %v1335 = vrot.slane %v1331, 6
  %1336 = vrot.lane.b32.xlu0 %v1332, 32
  %v1337 = vpop.permute.xlu0 %1336
  %1338 = vrot.lane.b32.xlu0 %v1333, 32
  %v1339 = vpop.permute.xlu0 %1338
  %1340 = vrot.lane.b32.xlu0 %v1334, 32
  %v1341 = vpop.permute.xlu0 %1340
  %1342 = vrot.lane.b32.xlu0 %v1335, 32
  %v1343 = vpop.permute.xlu0 %1342
  %vm1348 = vcmask 256002
  %vm1349 = vsmask.f32 2304
  %vm1350 = vmand %vm1348, %vm1349
  %v1351 = vld [vmem:[%s2] sm:$0x4]
  %v1352 = vsel %vm1350, %v1337, %v1351
  %1353 = vst [vmem:[%s2] sm:$0x4] %v1352
  %v1354 = vld [vmem:[%s2 + $0x4] sm:$0x4]
  %v1355 = vsel %vm1350, %v1339, %v1354
  %1356 = vst [vmem:[%s2 + $0x4] sm:$0x4] %v1355
  %v1357 = vld [vmem:[%s2 + $0x8] sm:$0x4]
  %v1358 = vsel %vm1350, %v1341, %v1357
  %1359 = vst [vmem:[%s2 + $0x8] sm:$0x4] %v1358
  %v1360 = vld [vmem:[%s2 + $0xc] sm:$0x4]
  %v1361 = vsel %vm1350, %v1343, %v1360
  %1362 = vst [vmem:[%s2 + $0xc] sm:$0x4] %v1361
  %v1363 = vld [vmem:[#allocation2] sm:$0xf]
  %v1364 = vpack.c.bf16 %v1363, %v1363
  %v1365 = vld [vmem:[%s0 + $0x5] sm:$0x1]
  %v1366 = vld [vmem:[%s0 + $0xd] sm:$0x1]
  %v1367 = vld [vmem:[%s0 + $0x15] sm:$0x1]
  %v1368 = vld [vmem:[%s0 + $0x1d] sm:$0x1]
  %v1369 = vld [vmem:[%s1] sm:$0xf]
  %v1370 = vld [vmem:[%s1 + $0x4] sm:$0xf]
  %v1371 = vld [vmem:[%s1 + $0x8] sm:$0xf]
  %v1372 = vld [vmem:[%s1 + $0xc] sm:$0xf]
  %v1377 = vunpack.c.l.b16 %v1369
  %v1378 = vunpack.c.l.b16 %v1370
  %v1379 = vunpack.c.l.b16 %v1371
  %v1380 = vunpack.c.l.b16 %v1372
  %v1381 = vpack.c.b16 %v1378, %v1377
  %v1382 = vpack.c.b16 %v1380, %v1379
  %v1386 = vsel %vm41, %v1364, 0
  %1388 = vmatprep.subr.bf16.mxu0 0
  %1389 = vmatpush1.bf16.msra.mxu0 0
  %1390 = vmatprep.subr.bf16.mxu0 0
  %1391 = vmatpush1.bf16.msra.mxu0 0
  %1392 = vmatprep.subr.bf16.mxu0 0
  %1393 = vmatpush1.bf16.msra.mxu0 0
  %1394 = vmatprep.subr.bf16.mxu0 0
  %1395 = vmatpush1.bf16.msra.mxu0 0
  %1396 = vmatprep.subr.bf16.mxu0 0
  %1397 = vmatpush1.bf16.msra.mxu0 0
  %1398 = vmatprep.subr.bf16.mxu0 0
  %1399 = vmatpush1.bf16.msra.mxu0 0
  %1400 = vmatprep.subr.bf16.mxu0 0
  %1401 = vmatpush1.bf16.msra.mxu0 %v1382
  %1402 = vmatprep.subr.bf16.mxu0 0
  %1403 = vmatpush1.bf16.msra.mxu0 %v1381
  %1404 = vmatprep.subr.bf16.mxu0 0
  %1405 = vmatpush2.bf16.msra.mxu0 0
  %1406 = vmatprep.subr.bf16.mxu0 0
  %1407 = vmatpush2.bf16.msra.mxu0 0
  %1408 = vmatprep.subr.bf16.mxu0 0
  %1409 = vmatpush2.bf16.msra.mxu0 0
  %1410 = vmatprep.subr.bf16.mxu0 0
  %1411 = vmatpush2.bf16.msra.mxu0 0
  %1412 = vmatprep.subr.bf16.mxu0 0
  %1413 = vmatpush2.bf16.msra.mxu0 0
  %1414 = vmatprep.subr.bf16.mxu0 0
  %1415 = vmatpush2.bf16.msra.mxu0 0
  %1416 = vmatprep.subr.bf16.mxu0 0
  %1417 = vmatpush2.bf16.msra.mxu0 0
  %1418 = vmatprep.subr.bf16.mxu0 0
  %1419 = vmatpush2.bf16.msra.mxu0 0
  %1420 = vmatprep.mubr.bf16.mxu0 0
  %1421 = vmatmul.mubr.bf16.gmra.mxu0 %v1386
  %v1422 = vpop.f32.mrf.mxu0
  %v1423 = vadd.f32 0.0, %v1422
  %v1424 = vpop.f32.mrf.mxu0
  %v1425 = vpop.f32.mrf.mxu0
  %v1426 = vpop.f32.mrf.mxu0
  %1427 = vdwg.mxu0
  %v1429 = vrot.slane %v1423, 1
  %v1430 = vrot.slane %v1423, 2
  %v1431 = vrot.slane %v1423, 3
  %v1436 = vadd.f32 %v1365, %v1423
  %v1437 = vadd.f32 %v1366, %v1429
  %v1438 = vadd.f32 %v1367, %v1430
  %v1439 = vadd.f32 %v1368, %v1431
  %v1440 = vxor.u32 %v1436, 2147483648
  %v1441 = vxor.u32 %v1437, 2147483648
  %v1442 = vxor.u32 %v1438, 2147483648
  %v1443 = vxor.u32 %v1439, 2147483648
  %v1444 = vmul.f32 %v1440, 1.442695
  %v1445 = vpow.pop %v1444
  %v1446 = vmul.f32 %v1441, 1.442695
  %v1447 = vpow.pop %v1446
  %v1448 = vmul.f32 %v1442, 1.442695
  %v1449 = vpow.pop %v1448
  %v1450 = vmul.f32 %v1443, 1.442695
  %v1451 = vpow.pop %v1450
  %v1452 = vadd.f32 %v1445, 1.0
  %v1453 = vadd.f32 %v1447, 1.0
  %v1454 = vadd.f32 %v1449, 1.0
  %v1455 = vadd.f32 %v1451, 1.0
  %v1456 = vrcp.pop %v1452
  %v1457 = vmul.f32 1.0, %v1456
  %v1458 = vrcp.pop %v1453
  %v1459 = vmul.f32 1.0, %v1458
  %v1460 = vrcp.pop %v1454
  %v1461 = vmul.f32 1.0, %v1460
  %v1462 = vrcp.pop %v1455
  %v1463 = vmul.f32 1.0, %v1462
  %v1464 = vtanh.pop %v1436
  %v1465 = vtanh.pop %v1437
  %v1466 = vtanh.pop %v1438
  %v1467 = vtanh.pop %v1439
  %v1468 = vld [vmem:[#allocation3] sm:$0xf]
  %v1470 = vrot.slane %v1468, 1
  %v1471 = vrot.slane %v1468, 2
  %v1472 = vrot.slane %v1468, 3
  %1473 = vrot.lane.b32.xlu0 %v1468, 32
  %v1474 = vpop.permute.xlu0 %1473
  %1475 = vrot.lane.b32.xlu0 %v1470, 32
  %v1476 = vpop.permute.xlu0 %1475
  %1477 = vrot.lane.b32.xlu0 %v1471, 32
  %v1478 = vpop.permute.xlu0 %1477
  %1479 = vrot.lane.b32.xlu0 %v1472, 32
  %v1480 = vpop.permute.xlu0 %1479
  %v1485 = vmul.f32 %v1457, %v1474
  %v1486 = vmul.f32 %v1459, %v1476
  %v1487 = vmul.f32 %v1461, %v1478
  %v1488 = vmul.f32 %v1463, %v1480
  %1493 = vrot.lane.b32.xlu0 %v1464, 64
  %v1494 = vpop.permute.xlu0 %1493
  %1495 = vrot.lane.b32.xlu0 %v1465, 64
  %v1496 = vpop.permute.xlu0 %1495
  %1497 = vrot.lane.b32.xlu0 %v1466, 64
  %v1498 = vpop.permute.xlu0 %1497
  %1499 = vrot.lane.b32.xlu0 %v1467, 64
  %v1500 = vpop.permute.xlu0 %1499
  %v1505 = vmul.f32 %v1457, %v1494
  %v1506 = vmul.f32 %v1459, %v1496
  %v1507 = vmul.f32 %v1461, %v1498
  %v1508 = vmul.f32 %v1463, %v1500
  %1513 = vrot.lane.b32.xlu0 %v1505, 32
  %v1514 = vpop.permute.xlu0 %1513
  %1515 = vrot.lane.b32.xlu0 %v1506, 32
  %v1516 = vpop.permute.xlu0 %1515
  %1517 = vrot.lane.b32.xlu0 %v1507, 32
  %v1518 = vpop.permute.xlu0 %1517
  %1519 = vrot.lane.b32.xlu0 %v1508, 32
  %v1520 = vpop.permute.xlu0 %1519
  %v1525 = vadd.f32 %v1485, %v1514
  %v1526 = vadd.f32 %v1486, %v1516
  %v1527 = vadd.f32 %v1487, %v1518
  %v1528 = vadd.f32 %v1488, %v1520
  %v1529 = vtanh.pop %v1525
  %v1530 = vtanh.pop %v1526
  %v1531 = vtanh.pop %v1527
  %v1532 = vtanh.pop %v1528
  %1537 = vrot.lane.b32.xlu0 %v1529, 64
  %v1538 = vpop.permute.xlu0 %1537
  %1539 = vrot.lane.b32.xlu0 %v1530, 64
  %v1540 = vpop.permute.xlu0 %1539
  %1541 = vrot.lane.b32.xlu0 %v1531, 64
  %v1542 = vpop.permute.xlu0 %1541
  %1543 = vrot.lane.b32.xlu0 %v1532, 64
  %v1544 = vpop.permute.xlu0 %1543
  %v1549 = vmul.f32 %v1457, %v1538
  %v1550 = vmul.f32 %v1459, %v1540
  %v1551 = vmul.f32 %v1461, %v1542
  %v1552 = vmul.f32 %v1463, %v1544
  %v1557 = vrot.slane %v1526, 7
  %v1558 = vsel %vm215, %v1557, %v1525
  %v1559 = vrot.slane %v1527, 6
  %v1560 = vsel %vm218, %v1559, %v1558
  %v1561 = vrot.slane %v1528, 5
  %v1562 = vsel %vm221, %v1561, %v1560
  %1563 = vrot.lane.b32.xlu0 %v1562, 96
  %v1564 = vpop.permute.xlu0 %1563
  %1566 = vst.msk [vmem:[#allocation3] sm:$0xf] %vm226, %v1564
  %v1571 = vrot.slane %v1550, 7
  %v1572 = vsel %vm215, %v1571, %v1549
  %v1573 = vrot.slane %v1551, 6
  %v1574 = vsel %vm218, %v1573, %v1572
  %v1575 = vrot.slane %v1552, 5
  %v1576 = vsel %vm221, %v1575, %v1574
  %1577 = vrot.lane.b32.xlu0 %v1576, 32
  %v1578 = vpop.permute.xlu0 %1577
  %1580 = vst.msk [vmem:[#allocation2] sm:$0xf] %vm226, %v1578
  %v1581 = vpack.c.bf16 %v1549, %v1549
  %v1582 = vpack.c.bf16 %v1550, %v1550
  %v1583 = vpack.c.bf16 %v1551, %v1551
  %v1584 = vpack.c.bf16 %v1552, %v1552
  %v1589 = vunpack.c.l.b16 %v1581
  %v1590 = vunpack.c.l.b16 %v1582
  %v1591 = vunpack.c.l.b16 %v1583
  %v1592 = vunpack.c.l.b16 %v1584
  %v1593 = vpack.c.b16 %v1589, %v1589
  %v1594 = vpack.c.b16 %v1590, %v1590
  %v1595 = vpack.c.b16 %v1591, %v1591
  %v1596 = vpack.c.b16 %v1592, %v1592
  %v1598 = vshll.u32 %v1593, 16
  %v1600 = vrot.slane %v1598, 6
  %v1602 = vshll.u32 %v1594, 16
  %v1604 = vrot.slane %v1602, 6
  %v1606 = vshll.u32 %v1595, 16
  %v1608 = vrot.slane %v1606, 6
  %v1610 = vshll.u32 %v1596, 16
  %v1612 = vrot.slane %v1610, 6
  %1613 = vrot.lane.b32.xlu0 %v1600, 32
  %v1614 = vpop.permute.xlu0 %1613
  %1615 = vrot.lane.b32.xlu0 %v1604, 32
  %v1616 = vpop.permute.xlu0 %1615
  %1617 = vrot.lane.b32.xlu0 %v1608, 32
  %v1618 = vpop.permute.xlu0 %1617
  %1619 = vrot.lane.b32.xlu0 %v1612, 32
  %v1620 = vpop.permute.xlu0 %1619
  %vm1625 = vsmask.f32 7946
  %vm1626 = vmand %vm1348, %vm1625
  %v1627 = vld [vmem:[%s2] sm:$0x4]
  %v1628 = vsel %vm1626, %v1614, %v1627
  %1629 = vst [vmem:[%s2] sm:$0x4] %v1628
  %v1630 = vld [vmem:[%s2 + $0x4] sm:$0x4]
  %v1631 = vsel %vm1626, %v1616, %v1630
  %1632 = vst [vmem:[%s2 + $0x4] sm:$0x4] %v1631
  %v1633 = vld [vmem:[%s2 + $0x8] sm:$0x4]
  %v1634 = vsel %vm1626, %v1618, %v1633
  %1635 = vst [vmem:[%s2 + $0x8] sm:$0x4] %v1634
  %v1636 = vld [vmem:[%s2 + $0xc] sm:$0x4]
  %v1637 = vsel %vm1626, %v1620, %v1636
  %1638 = vst [vmem:[%s2 + $0xc] sm:$0x4] %v1637
  %v1639 = vld [vmem:[#allocation2] sm:$0xf]
  %v1640 = vpack.c.bf16 %v1639, %v1639
  %v1641 = vld [vmem:[%s0 + $0x6] sm:$0x1]
  %v1642 = vld [vmem:[%s0 + $0xe] sm:$0x1]
  %v1643 = vld [vmem:[%s0 + $0x16] sm:$0x1]
  %v1644 = vld [vmem:[%s0 + $0x1e] sm:$0x1]
  %v1645 = vld [vmem:[%s1] sm:$0xf]
  %v1646 = vld [vmem:[%s1 + $0x4] sm:$0xf]
  %v1647 = vld [vmem:[%s1 + $0x8] sm:$0xf]
  %v1648 = vld [vmem:[%s1 + $0xc] sm:$0xf]
  %v1653 = vunpack.c.l.b16 %v1645
  %v1654 = vunpack.c.l.b16 %v1646
  %v1655 = vunpack.c.l.b16 %v1647
  %v1656 = vunpack.c.l.b16 %v1648
  %v1657 = vpack.c.b16 %v1654, %v1653
  %v1658 = vpack.c.b16 %v1656, %v1655
  %v1662 = vsel %vm41, %v1640, 0
  %1664 = vmatprep.subr.bf16.mxu0 0
  %1665 = vmatpush1.bf16.msra.mxu0 0
  %1666 = vmatprep.subr.bf16.mxu0 0
  %1667 = vmatpush1.bf16.msra.mxu0 0
  %1668 = vmatprep.subr.bf16.mxu0 0
  %1669 = vmatpush1.bf16.msra.mxu0 0
  %1670 = vmatprep.subr.bf16.mxu0 0
  %1671 = vmatpush1.bf16.msra.mxu0 0
  %1672 = vmatprep.subr.bf16.mxu0 0
  %1673 = vmatpush1.bf16.msra.mxu0 0
  %1674 = vmatprep.subr.bf16.mxu0 0
  %1675 = vmatpush1.bf16.msra.mxu0 0
  %1676 = vmatprep.subr.bf16.mxu0 0
  %1677 = vmatpush1.bf16.msra.mxu0 %v1658
  %1678 = vmatprep.subr.bf16.mxu0 0
  %1679 = vmatpush1.bf16.msra.mxu0 %v1657
  %1680 = vmatprep.subr.bf16.mxu0 0
  %1681 = vmatpush2.bf16.msra.mxu0 0
  %1682 = vmatprep.subr.bf16.mxu0 0
  %1683 = vmatpush2.bf16.msra.mxu0 0
  %1684 = vmatprep.subr.bf16.mxu0 0
  %1685 = vmatpush2.bf16.msra.mxu0 0
  %1686 = vmatprep.subr.bf16.mxu0 0
  %1687 = vmatpush2.bf16.msra.mxu0 0
  %1688 = vmatprep.subr.bf16.mxu0 0
  %1689 = vmatpush2.bf16.msra.mxu0 0
  %1690 = vmatprep.subr.bf16.mxu0 0
  %1691 = vmatpush2.bf16.msra.mxu0 0
  %1692 = vmatprep.subr.bf16.mxu0 0
  %1693 = vmatpush2.bf16.msra.mxu0 0
  %1694 = vmatprep.subr.bf16.mxu0 0
  %1695 = vmatpush2.bf16.msra.mxu0 0
  %1696 = vmatprep.mubr.bf16.mxu0 0
  %1697 = vmatmul.mubr.bf16.gmra.mxu0 %v1662
  %v1698 = vpop.f32.mrf.mxu0
  %v1699 = vadd.f32 0.0, %v1698
  %v1700 = vpop.f32.mrf.mxu0
  %v1701 = vpop.f32.mrf.mxu0
  %v1702 = vpop.f32.mrf.mxu0
  %1703 = vdwg.mxu0
  %v1705 = vrot.slane %v1699, 1
  %v1706 = vrot.slane %v1699, 2
  %v1707 = vrot.slane %v1699, 3
  %v1712 = vadd.f32 %v1641, %v1699
  %v1713 = vadd.f32 %v1642, %v1705
  %v1714 = vadd.f32 %v1643, %v1706
  %v1715 = vadd.f32 %v1644, %v1707
  %v1716 = vxor.u32 %v1712, 2147483648
  %v1717 = vxor.u32 %v1713, 2147483648
  %v1718 = vxor.u32 %v1714, 2147483648
  %v1719 = vxor.u32 %v1715, 2147483648
  %v1720 = vmul.f32 %v1716, 1.442695
  %v1721 = vpow.pop %v1720
  %v1722 = vmul.f32 %v1717, 1.442695
  %v1723 = vpow.pop %v1722
  %v1724 = vmul.f32 %v1718, 1.442695
  %v1725 = vpow.pop %v1724
  %v1726 = vmul.f32 %v1719, 1.442695
  %v1727 = vpow.pop %v1726
  %v1728 = vadd.f32 %v1721, 1.0
  %v1729 = vadd.f32 %v1723, 1.0
  %v1730 = vadd.f32 %v1725, 1.0
  %v1731 = vadd.f32 %v1727, 1.0
  %v1732 = vrcp.pop %v1728
  %v1733 = vmul.f32 1.0, %v1732
  %v1734 = vrcp.pop %v1729
  %v1735 = vmul.f32 1.0, %v1734
  %v1736 = vrcp.pop %v1730
  %v1737 = vmul.f32 1.0, %v1736
  %v1738 = vrcp.pop %v1731
  %v1739 = vmul.f32 1.0, %v1738
  %v1740 = vtanh.pop %v1712
  %v1741 = vtanh.pop %v1713
  %v1742 = vtanh.pop %v1714
  %v1743 = vtanh.pop %v1715
  %v1744 = vld [vmem:[#allocation3] sm:$0xf]
  %v1746 = vrot.slane %v1744, 1
  %v1747 = vrot.slane %v1744, 2
  %v1748 = vrot.slane %v1744, 3
  %1749 = vrot.lane.b32.xlu0 %v1744, 32
  %v1750 = vpop.permute.xlu0 %1749
  %1751 = vrot.lane.b32.xlu0 %v1746, 32
  %v1752 = vpop.permute.xlu0 %1751
  %1753 = vrot.lane.b32.xlu0 %v1747, 32
  %v1754 = vpop.permute.xlu0 %1753
  %1755 = vrot.lane.b32.xlu0 %v1748, 32
  %v1756 = vpop.permute.xlu0 %1755
  %v1761 = vmul.f32 %v1733, %v1750
  %v1762 = vmul.f32 %v1735, %v1752
  %v1763 = vmul.f32 %v1737, %v1754
  %v1764 = vmul.f32 %v1739, %v1756
  %1769 = vrot.lane.b32.xlu0 %v1740, 64
  %v1770 = vpop.permute.xlu0 %1769
  %1771 = vrot.lane.b32.xlu0 %v1741, 64
  %v1772 = vpop.permute.xlu0 %1771
  %1773 = vrot.lane.b32.xlu0 %v1742, 64
  %v1774 = vpop.permute.xlu0 %1773
  %1775 = vrot.lane.b32.xlu0 %v1743, 64
  %v1776 = vpop.permute.xlu0 %1775
  %v1781 = vmul.f32 %v1733, %v1770
  %v1782 = vmul.f32 %v1735, %v1772
  %v1783 = vmul.f32 %v1737, %v1774
  %v1784 = vmul.f32 %v1739, %v1776
  %1789 = vrot.lane.b32.xlu0 %v1781, 32
  %v1790 = vpop.permute.xlu0 %1789
  %1791 = vrot.lane.b32.xlu0 %v1782, 32
  %v1792 = vpop.permute.xlu0 %1791
  %1793 = vrot.lane.b32.xlu0 %v1783, 32
  %v1794 = vpop.permute.xlu0 %1793
  %1795 = vrot.lane.b32.xlu0 %v1784, 32
  %v1796 = vpop.permute.xlu0 %1795
  %v1801 = vadd.f32 %v1761, %v1790
  %v1802 = vadd.f32 %v1762, %v1792
  %v1803 = vadd.f32 %v1763, %v1794
  %v1804 = vadd.f32 %v1764, %v1796
  %v1805 = vtanh.pop %v1801
  %v1806 = vtanh.pop %v1802
  %v1807 = vtanh.pop %v1803
  %v1808 = vtanh.pop %v1804
  %1813 = vrot.lane.b32.xlu0 %v1805, 64
  %v1814 = vpop.permute.xlu0 %1813
  %1815 = vrot.lane.b32.xlu0 %v1806, 64
  %v1816 = vpop.permute.xlu0 %1815
  %1817 = vrot.lane.b32.xlu0 %v1807, 64
  %v1818 = vpop.permute.xlu0 %1817
  %1819 = vrot.lane.b32.xlu0 %v1808, 64
  %v1820 = vpop.permute.xlu0 %1819
  %v1825 = vmul.f32 %v1733, %v1814
  %v1826 = vmul.f32 %v1735, %v1816
  %v1827 = vmul.f32 %v1737, %v1818
  %v1828 = vmul.f32 %v1739, %v1820
  %v1833 = vrot.slane %v1802, 7
  %v1834 = vsel %vm215, %v1833, %v1801
  %v1835 = vrot.slane %v1803, 6
  %v1836 = vsel %vm218, %v1835, %v1834
  %v1837 = vrot.slane %v1804, 5
  %v1838 = vsel %vm221, %v1837, %v1836
  %1839 = vrot.lane.b32.xlu0 %v1838, 96
  %v1840 = vpop.permute.xlu0 %1839
  %1842 = vst.msk [vmem:[#allocation3] sm:$0xf] %vm226, %v1840
  %v1847 = vrot.slane %v1826, 7
  %v1848 = vsel %vm215, %v1847, %v1825
  %v1849 = vrot.slane %v1827, 6
  %v1850 = vsel %vm218, %v1849, %v1848
  %v1851 = vrot.slane %v1828, 5
  %v1852 = vsel %vm221, %v1851, %v1850
  %1853 = vrot.lane.b32.xlu0 %v1852, 32
  %v1854 = vpop.permute.xlu0 %1853
  %1856 = vst.msk [vmem:[#allocation2] sm:$0xf] %vm226, %v1854
  %v1857 = vpack.c.bf16 %v1825, %v1825
  %v1858 = vpack.c.bf16 %v1826, %v1826
  %v1859 = vpack.c.bf16 %v1827, %v1827
  %v1860 = vpack.c.bf16 %v1828, %v1828
  %v1865 = vunpack.c.l.b16 %v1857
  %v1866 = vunpack.c.l.b16 %v1858
  %v1867 = vunpack.c.l.b16 %v1859
  %v1868 = vunpack.c.l.b16 %v1860
  %v1869 = vpack.c.b16 %v1865, %v1865
  %v1870 = vpack.c.b16 %v1866, %v1866
  %v1871 = vpack.c.b16 %v1867, %v1867
  %v1872 = vpack.c.b16 %v1868, %v1868
  %v1873 = vrot.slane %v1869, 5
  %v1874 = vrot.slane %v1870, 5
  %v1875 = vrot.slane %v1871, 5
  %v1876 = vrot.slane %v1872, 5
  %1877 = vrot.lane.b32.xlu0 %v1873, 32
  %v1878 = vpop.permute.xlu0 %1877
  %1879 = vrot.lane.b32.xlu0 %v1874, 32
  %v1880 = vpop.permute.xlu0 %1879
  %1881 = vrot.lane.b32.xlu0 %v1875, 32
  %v1882 = vpop.permute.xlu0 %1881
  %1883 = vrot.lane.b32.xlu0 %v1876, 32
  %v1884 = vpop.permute.xlu0 %1883
  %vm1889 = vcmask 257027
  %vm1890 = vsmask.f32 3328
  %vm1891 = vmand %vm1889, %vm1890
  %v1892 = vld [vmem:[%s2] sm:$0x8]
  %v1893 = vsel %vm1891, %v1878, %v1892
  %1894 = vst [vmem:[%s2] sm:$0x8] %v1893
  %v1895 = vld [vmem:[%s2 + $0x4] sm:$0x8]
  %v1896 = vsel %vm1891, %v1880, %v1895
  %1897 = vst [vmem:[%s2 + $0x4] sm:$0x8] %v1896
  %v1898 = vld [vmem:[%s2 + $0x8] sm:$0x8]
  %v1899 = vsel %vm1891, %v1882, %v1898
  %1900 = vst [vmem:[%s2 + $0x8] sm:$0x8] %v1899
  %v1901 = vld [vmem:[%s2 + $0xc] sm:$0x8]
  %v1902 = vsel %vm1891, %v1884, %v1901
  %1903 = vst [vmem:[%s2 + $0xc] sm:$0x8] %v1902
  %v1904 = vld [vmem:[#allocation2] sm:$0xf]
  %v1905 = vpack.c.bf16 %v1904, %v1904
  %v1906 = vld [vmem:[%s0 + $0x7] sm:$0x1]
  %v1907 = vld [vmem:[%s0 + $0xf] sm:$0x1]
  %v1908 = vld [vmem:[%s0 + $0x17] sm:$0x1]
  %v1909 = vld [vmem:[%s0 + $0x1f] sm:$0x1]
  %v1910 = vld [vmem:[%s1] sm:$0xf]
  %v1911 = vld [vmem:[%s1 + $0x4] sm:$0xf]
  %v1912 = vld [vmem:[%s1 + $0x8] sm:$0xf]
  %v1913 = vld [vmem:[%s1 + $0xc] sm:$0xf]
  %v1918 = vunpack.c.l.b16 %v1910
  %v1919 = vunpack.c.l.b16 %v1911
  %v1920 = vunpack.c.l.b16 %v1912
  %v1921 = vunpack.c.l.b16 %v1913
  %v1922 = vpack.c.b16 %v1919, %v1918
  %v1923 = vpack.c.b16 %v1921, %v1920
  %v1927 = vsel %vm41, %v1905, 0
  %1929 = vmatprep.subr.bf16.mxu0 0
  %1930 = vmatpush1.bf16.msra.mxu0 0
  %1931 = vmatprep.subr.bf16.mxu0 0
  %1932 = vmatpush1.bf16.msra.mxu0 0
  %1933 = vmatprep.subr.bf16.mxu0 0
  %1934 = vmatpush1.bf16.msra.mxu0 0
  %1935 = vmatprep.subr.bf16.mxu0 0
  %1936 = vmatpush1.bf16.msra.mxu0 0
  %1937 = vmatprep.subr.bf16.mxu0 0
  %1938 = vmatpush1.bf16.msra.mxu0 0
  %1939 = vmatprep.subr.bf16.mxu0 0
  %1940 = vmatpush1.bf16.msra.mxu0 0
  %1941 = vmatprep.subr.bf16.mxu0 0
  %1942 = vmatpush1.bf16.msra.mxu0 %v1923
  %1943 = vmatprep.subr.bf16.mxu0 0
  %1944 = vmatpush1.bf16.msra.mxu0 %v1922
  %1945 = vmatprep.subr.bf16.mxu0 0
  %1946 = vmatpush2.bf16.msra.mxu0 0
  %1947 = vmatprep.subr.bf16.mxu0 0
  %1948 = vmatpush2.bf16.msra.mxu0 0
  %1949 = vmatprep.subr.bf16.mxu0 0
  %1950 = vmatpush2.bf16.msra.mxu0 0
  %1951 = vmatprep.subr.bf16.mxu0 0
  %1952 = vmatpush2.bf16.msra.mxu0 0
  %1953 = vmatprep.subr.bf16.mxu0 0
  %1954 = vmatpush2.bf16.msra.mxu0 0
  %1955 = vmatprep.subr.bf16.mxu0 0
  %1956 = vmatpush2.bf16.msra.mxu0 0
  %1957 = vmatprep.subr.bf16.mxu0 0
  %1958 = vmatpush2.bf16.msra.mxu0 0
  %1959 = vmatprep.subr.bf16.mxu0 0
  %1960 = vmatpush2.bf16.msra.mxu0 0
  %1961 = vmatprep.mubr.bf16.mxu0 0
  %1962 = vmatmul.mubr.bf16.gmra.mxu0 %v1927
  %v1963 = vpop.f32.mrf.mxu0
  %v1964 = vadd.f32 0.0, %v1963
  %v1965 = vpop.f32.mrf.mxu0
  %v1966 = vpop.f32.mrf.mxu0
  %v1967 = vpop.f32.mrf.mxu0
  %1968 = vdwg.mxu0
  %v1970 = vrot.slane %v1964, 1
  %v1971 = vrot.slane %v1964, 2
  %v1972 = vrot.slane %v1964, 3
  %v1977 = vadd.f32 %v1906, %v1964
  %v1978 = vadd.f32 %v1907, %v1970
  %v1979 = vadd.f32 %v1908, %v1971
  %v1980 = vadd.f32 %v1909, %v1972
  %v1981 = vxor.u32 %v1977, 2147483648
  %v1982 = vxor.u32 %v1978, 2147483648
  %v1983 = vxor.u32 %v1979, 2147483648
  %v1984 = vxor.u32 %v1980, 2147483648
  %v1985 = vmul.f32 %v1981, 1.442695
  %v1986 = vpow.pop %v1985
  %v1987 = vmul.f32 %v1982, 1.442695
  %v1988 = vpow.pop %v1987
  %v1989 = vmul.f32 %v1983, 1.442695
  %v1990 = vpow.pop %v1989
  %v1991 = vmul.f32 %v1984, 1.442695
  %v1992 = vpow.pop %v1991
  %v1993 = vadd.f32 %v1986, 1.0
  %v1994 = vadd.f32 %v1988, 1.0
  %v1995 = vadd.f32 %v1990, 1.0
  %v1996 = vadd.f32 %v1992, 1.0
  %v1997 = vrcp.pop %v1993
  %v1998 = vmul.f32 1.0, %v1997
  %v1999 = vrcp.pop %v1994
  %v2000 = vmul.f32 1.0, %v1999
  %v2001 = vrcp.pop %v1995
  %v2002 = vmul.f32 1.0, %v2001
  %v2003 = vrcp.pop %v1996
  %v2004 = vmul.f32 1.0, %v2003
  %v2005 = vtanh.pop %v1977
  %v2006 = vtanh.pop %v1978
  %v2007 = vtanh.pop %v1979
  %v2008 = vtanh.pop %v1980
  %v2009 = vld [vmem:[#allocation3] sm:$0xf]
  %v2011 = vrot.slane %v2009, 1
  %v2012 = vrot.slane %v2009, 2
  %v2013 = vrot.slane %v2009, 3
  %2014 = vrot.lane.b32.xlu0 %v2009, 32
  %v2015 = vpop.permute.xlu0 %2014
  %2016 = vrot.lane.b32.xlu0 %v2011, 32
  %v2017 = vpop.permute.xlu0 %2016
  %2018 = vrot.lane.b32.xlu0 %v2012, 32
  %v2019 = vpop.permute.xlu0 %2018
  %2020 = vrot.lane.b32.xlu0 %v2013, 32
  %v2021 = vpop.permute.xlu0 %2020
  %v2026 = vmul.f32 %v1998, %v2015
  %v2027 = vmul.f32 %v2000, %v2017
  %v2028 = vmul.f32 %v2002, %v2019
  %v2029 = vmul.f32 %v2004, %v2021
  %2034 = vrot.lane.b32.xlu0 %v2005, 64
  %v2035 = vpop.permute.xlu0 %2034
  %2036 = vrot.lane.b32.xlu0 %v2006, 64
  %v2037 = vpop.permute.xlu0 %2036
  %2038 = vrot.lane.b32.xlu0 %v2007, 64
  %v2039 = vpop.permute.xlu0 %2038
  %2040 = vrot.lane.b32.xlu0 %v2008, 64
  %v2041 = vpop.permute.xlu0 %2040
  %v2046 = vmul.f32 %v1998, %v2035
  %v2047 = vmul.f32 %v2000, %v2037
  %v2048 = vmul.f32 %v2002, %v2039
  %v2049 = vmul.f32 %v2004, %v2041
  %2054 = vrot.lane.b32.xlu0 %v2046, 32
  %v2055 = vpop.permute.xlu0 %2054
  %2056 = vrot.lane.b32.xlu0 %v2047, 32
  %v2057 = vpop.permute.xlu0 %2056
  %2058 = vrot.lane.b32.xlu0 %v2048, 32
  %v2059 = vpop.permute.xlu0 %2058
  %2060 = vrot.lane.b32.xlu0 %v2049, 32
  %v2061 = vpop.permute.xlu0 %2060
  %v2066 = vadd.f32 %v2026, %v2055
  %v2067 = vadd.f32 %v2027, %v2057
  %v2068 = vadd.f32 %v2028, %v2059
  %v2069 = vadd.f32 %v2029, %v2061
  %v2070 = vtanh.pop %v2066
  %v2071 = vtanh.pop %v2067
  %v2072 = vtanh.pop %v2068
  %v2073 = vtanh.pop %v2069
  %2078 = vrot.lane.b32.xlu0 %v2070, 64
  %v2079 = vpop.permute.xlu0 %2078
  %2080 = vrot.lane.b32.xlu0 %v2071, 64
  %v2081 = vpop.permute.xlu0 %2080
  %2082 = vrot.lane.b32.xlu0 %v2072, 64
  %v2083 = vpop.permute.xlu0 %2082
  %2084 = vrot.lane.b32.xlu0 %v2073, 64
  %v2085 = vpop.permute.xlu0 %2084
  %v2090 = vmul.f32 %v1998, %v2079
  %v2091 = vmul.f32 %v2000, %v2081
  %v2092 = vmul.f32 %v2002, %v2083
  %v2093 = vmul.f32 %v2004, %v2085
  %v2098 = vrot.slane %v2067, 7
  %v2099 = vsel %vm215, %v2098, %v2066
  %v2100 = vrot.slane %v2068, 6
  %v2101 = vsel %vm218, %v2100, %v2099
  %v2102 = vrot.slane %v2069, 5
  %v2103 = vsel %vm221, %v2102, %v2101
  %2104 = vrot.lane.b32.xlu0 %v2103, 96
  %v2105 = vpop.permute.xlu0 %2104
  %2107 = vst.msk [vmem:[#allocation3] sm:$0xf] %vm226, %v2105
  %v2112 = vrot.slane %v2091, 7
  %v2113 = vsel %vm215, %v2112, %v2090
  %v2114 = vrot.slane %v2092, 6
  %v2115 = vsel %vm218, %v2114, %v2113
  %v2116 = vrot.slane %v2093, 5
  %v2117 = vsel %vm221, %v2116, %v2115
  %2118 = vrot.lane.b32.xlu0 %v2117, 32
  %v2119 = vpop.permute.xlu0 %2118
  %2121 = vst.msk [vmem:[#allocation2] sm:$0xf] %vm226, %v2119
  %v2122 = vpack.c.bf16 %v2090, %v2090
  %v2123 = vpack.c.bf16 %v2091, %v2091
  %v2124 = vpack.c.bf16 %v2092, %v2092
  %v2125 = vpack.c.bf16 %v2093, %v2093
  %v2130 = vunpack.c.l.b16 %v2122
  %v2131 = vunpack.c.l.b16 %v2123
  %v2132 = vunpack.c.l.b16 %v2124
  %v2133 = vunpack.c.l.b16 %v2125
  %v2134 = vpack.c.b16 %v2130, %v2130
  %v2135 = vpack.c.b16 %v2131, %v2131
  %v2136 = vpack.c.b16 %v2132, %v2132
  %v2137 = vpack.c.b16 %v2133, %v2133
  %v2139 = vshll.u32 %v2134, 16
  %v2141 = vrot.slane %v2139, 5
  %v2143 = vshll.u32 %v2135, 16
  %v2145 = vrot.slane %v2143, 5
  %v2147 = vshll.u32 %v2136, 16
  %v2149 = vrot.slane %v2147, 5
  %v2151 = vshll.u32 %v2137, 16
  %v2153 = vrot.slane %v2151, 5
  %2154 = vrot.lane.b32.xlu0 %v2141, 32
  %v2155 = vpop.permute.xlu0 %2154
  %2156 = vrot.lane.b32.xlu0 %v2145, 32
  %v2157 = vpop.permute.xlu0 %2156
  %2158 = vrot.lane.b32.xlu0 %v2149, 32
  %v2159 = vpop.permute.xlu0 %2158
  %2160 = vrot.lane.b32.xlu0 %v2153, 32
  %v2161 = vpop.permute.xlu0 %2160
  %vm2166 = vsmask.f32 7950
  %vm2167 = vmand %vm1889, %vm2166
  %v2168 = vld [vmem:[%s2] sm:$0x8]
  %v2169 = vsel %vm2167, %v2155, %v2168
  %2170 = vst [vmem:[%s2] sm:$0x8] %v2169
  %v2171 = vld [vmem:[%s2 + $0x4] sm:$0x8]
  %v2172 = vsel %vm2167, %v2157, %v2171
  %2173 = vst [vmem:[%s2 + $0x4] sm:$0x8] %v2172
  %v2174 = vld [vmem:[%s2 + $0x8] sm:$0x8]
  %v2175 = vsel %vm2167, %v2159, %v2174
  %2176 = vst [vmem:[%s2 + $0x8] sm:$0x8] %v2175
  %v2177 = vld [vmem:[%s2 + $0xc] sm:$0x8]
  %v2178 = vsel %vm2167, %v2161, %v2177
  %2179 = vst [vmem:[%s2 + $0xc] sm:$0x8] %v2178
  // Predicated region
  $region14: #{image_captioner_forward.4} parent=0 // pred_check
    _
  $region15: #{image_captioner_forward.4} parent=0 // pred_check_branch
    %2181 = sbr.rel (0) target = $region17
  $region16: #{image_captioner_forward.4} parent=0 // pred_region
    _
  $region17: #{image_captioner_forward.4} parent=0 // pred_fallthru
    _
  // Predicated region
  $region18: #{image_captioner_forward.4} parent=0 // pred_check
    _
  $region19: #{image_captioner_forward.4} parent=0 // pred_check_branch
    %2183 = sbr.rel (0) target = $region21
  $region20: #{image_captioner_forward.4} parent=0 // pred_region
    _
  $region21: #{image_captioner_forward.4} parent=0 // pred_fallthru
    _

</llo_original>
